<compile_context>
chip_gen: v7x
topology: tpu7x:2x2x1
jax: 0.10.0
libtpu: 0.0.40
codegen_flags: <defaults>
</compile_context>

<pallas_src>
import jax
import jax.numpy as jnp
from jax.experimental import pallas as pl
from jax.experimental.pallas import tpu as pltpu


def _round_up(x, m):
    return ((x + m - 1) // m) * m


def _linear_kernel(x_ref, w_ref, b_ref, o_ref):
    # x_ref: (tm, K) bf16; w_ref: (K, tn) bf16; b_ref: (1, tn) f32; o_ref: (tm, tn)
    acc = jnp.dot(x_ref[...], w_ref[...], preferred_element_type=jnp.float32)
    o_ref[...] = (acc + b_ref[...]).astype(o_ref.dtype)


def _vmem_budget_bytes():
    # 3/4 of physical per-core VMEM: ~96 MiB on v5e/v6e (128 MiB), ~48 MiB on
    # v7x (64 MiB). Falls back to a v7x-safe budget if the query is unavailable.
    try:
        cap = int(pltpu.get_tpu_info().vmem_capacity_bytes)
    except Exception:
        cap = 64 * 1024 * 1024
    return (cap * 3) // 4


def prepare_projector_params(weight_t, bias, *, compute_dtype=jnp.bfloat16):
    """One-time parameter prep (hoisted out of the per-call path).

    weight_t: [input_dim, output_dim] (i.e. nn.Linear weight, pre-transposed)
    bias:     [output_dim]
    Returns (w_prepped [K, N_pad] compute_dtype, b_prepped [1, N_pad] f32, N).
    """
    K, N = weight_t.shape
    N_pad = _round_up(N, 128)
    w = weight_t
    b = bias
    if N_pad != N:
        w = jnp.pad(w, ((0, 0), (0, N_pad - N)))
        b = jnp.pad(b, (0, N_pad - N))
    w = w.astype(compute_dtype)
    b2d = b.reshape(1, N_pad).astype(jnp.float32)
    return w, b2d, N


def vision_projector(x, w_prepped, b_prepped, n_out, *,
                     compute_dtype=jnp.bfloat16, out_dtype=None,
                     tm_max=256, tn_max=1024):
    """x: [..., input_dim]. Params must come from prepare_projector_params()."""
    orig_shape = x.shape
    K = orig_shape[-1]
    N_pad = w_prepped.shape[1]
    out_dtype = x.dtype if out_dtype is None else out_dtype

    x2d = x.reshape(-1, K)
    if x2d.dtype != compute_dtype:
        x2d = x2d.astype(compute_dtype)
    M = x2d.shape[0]

    # Small-shape fallback: lane padding + per-step overhead make Pallas a loss.
    if (K < 128) or (n_out < 128) or (M * K * n_out < (1 << 21)):
        acc = jnp.dot(x2d, w_prepped[:, :n_out], preferred_element_type=jnp.float32)
        out = (acc + b_prepped[0, :n_out]).astype(out_dtype)
        return out.reshape(*orig_shape[:-1], n_out)

    in_bytes = jnp.dtype(compute_dtype).itemsize
    out_bytes = jnp.dtype(out_dtype).itemsize
    budget = _vmem_budget_bytes()

    # tm: multiple of 8 (sublane); tn: multiple of 128 (lane-dense stores).
    tm = min(tm_max, _round_up(M, 8))

    def footprint(tm_, tn_):
        # double-buffered x, W, bias, output tiles
        return 2 * (tm_ * K * in_bytes + K * tn_ * in_bytes
                    + tn_ * 4 + tm_ * tn_ * out_bytes)

    tn_cap = min(tn_max, N_pad)
    tn = 128
    for cand in (1024, 512, 256, 128):
        if cand > tn_cap:
            continue
        if cand == 1024 and N_pad < 2048:
            continue  # keep >= 2 N-tiles for megacore / weight streaming
        if footprint(tm, cand) <= budget:
            tn = cand
            break
    # Extremely large K safety valve: shrink tm until the tiles fit.
    while footprint(tm, tn) > budget and tm > 8:
        tm = max(8, _round_up(tm // 2, 8))

    n_m = pl.cdiv(M, tm)
    n_n = pl.cdiv(N_pad, tn)

    # Pick the stationary operand by total HBM traffic.
    bytes_stream_x = n_n * M * K * in_bytes + K * N_pad * in_bytes   # W stationary
    bytes_stream_w = n_m * K * N_pad * in_bytes + M * K * in_bytes   # x stationary
    stream_w = bytes_stream_w <= bytes_stream_x

    if stream_w:
        # x tile stationary across the inner N axis; W slab streamed.
        grid = (n_m, n_n)
        x_map = lambda i, j: (i, 0)
        w_map = lambda i, j: (0, j)
        o_map = lambda i, j: (i, j)
    else:
        # W slab stationary across the inner M axis; x streamed.
        grid = (n_n, n_m)
        x_map = lambda j, i: (i, 0)
        w_map = lambda j, i: (0, j)
        o_map = lambda j, i: (i, j)

    cost = pl.CostEstimate(
        flops=2 * M * K * N_pad,
        transcendentals=0,
        bytes_accessed=(min(bytes_stream_x, bytes_stream_w)
                        + n_n * N_pad * 4            # bias re-reads (tiny)
                        + M * N_pad * out_bytes),    # output writeback
    )

    vmem_limit = int(min(budget, max(footprint(tm, tn) + (2 << 20),
                                     32 * 1024 * 1024)))

    # TODO(synk): add pipeline_mode=pl.Buffered(3) on the streamed operand if
    # profiling shows exposed DMA; default depth 2 is sufficient at these AIs.
    out = pl.pallas_call(
        _linear_kernel,
        out_shape=jax.ShapeDtypeStruct((M, N_pad), out_dtype),
        grid_spec=pltpu.PrefetchScalarGridSpec(
            num_scalar_prefetch=0,
            grid=grid,
            in_specs=[
                pl.BlockSpec((tm, K), x_map),   # activations
                pl.BlockSpec((K, tn), w_map),   # weights
                pl.BlockSpec((1, tn), w_map),   # bias
            ],
            out_specs=pl.BlockSpec((tm, tn), o_map),
        ),
        compiler_params=pltpu.CompilerParams(
            dimension_semantics=("parallel", "parallel"),
            vmem_limit_bytes=vmem_limit,
        ),
        cost_estimate=cost,
    )(x2d, w_prepped, b_prepped)

    if N_pad != n_out:
        out = out[:, :n_out]
    return out.reshape(*orig_shape[:-1], n_out)


if __name__ == "__main__":
    # VisionProjector-style shapes: a handful of image tokens projected into a
    # (larger) LLM hidden size. Small enough to run instantly, large enough to
    # exercise the tiled Pallas path (K, N >= 128).
    input_dim = 256
    output_dim = 2048
    batch, seq = 2, 64

    key = jax.random.PRNGKey(0)
    kx, kw, kb = jax.random.split(key, 3)

    # nn.Linear stores weight as [output_dim, input_dim]; we keep the
    # pre-transposed [input_dim, output_dim] form.
    bound = 1.0 / (input_dim ** 0.5)
    weight_t = jax.random.uniform(
        kw, (input_dim, output_dim), jnp.float32, minval=-bound, maxval=bound
    )
    bias = jax.random.uniform(
        kb, (output_dim,), jnp.float32, minval=-bound, maxval=bound
    )
    x = jax.random.normal(kx, (batch, seq, input_dim), jnp.float32)

    # One-time parameter prep (pad + bf16 cast), then the forward call.
    w_p, b_p, n_out = prepare_projector_params(weight_t, bias)
    out = vision_projector(x, w_p, b_p, n_out)
    out = jax.block_until_ready(out)

    assert out.shape == (batch, seq, output_dim)

    # Reference 1: same bf16-quantized inputs, exact f32 math (matches the
    # kernel's bf16-in / f32-accumulate datapath).
    xq = x.astype(jnp.bfloat16).astype(jnp.float32)
    wq = weight_t.astype(jnp.bfloat16).astype(jnp.float32)
    ref = jnp.dot(
        xq.reshape(-1, input_dim), wq, precision=jax.lax.Precision.HIGHEST
    ).reshape(batch, seq, output_dim) + bias
    assert jnp.allclose(out, ref, atol=2e-2, rtol=2e-2)

    # Reference 2: full-f32 nn.Linear (bf16 quantization tolerance).
    ref_f32 = x @ weight_t + bias
    assert jnp.allclose(out, ref_f32, atol=6e-2, rtol=6e-2)

    print("KERNEL_OK")
</pallas_src>

<mosaic_0001>
module attributes {stable_mosaic.version = 11 : i64} {
  func.func @_linear_kernel(%arg0: i32, %arg1: i32, %arg2: memref<128x256xbf16, #tpu.memory_space<vmem>>, %arg3: memref<256x1024xbf16, #tpu.memory_space<vmem>>, %arg4: memref<1x1024xf32, #tpu.memory_space<vmem>>, %arg5: memref<128x1024xf32, #tpu.memory_space<vmem>>) attributes {dimension_semantics = [#tpu.dimension_semantics<parallel>, #tpu.dimension_semantics<parallel>], iteration_bounds = array<i64: 1, 2>, scalar_prefetch = 0 : i64, scratch_operands = 0 : i64, tpu.core_type = #tpu.core_type<tc>, window_params = [{transform_indices = @transform_0, window_bounds = array<i64: 128, 256>}, {transform_indices = @transform_1, window_bounds = array<i64: 256, 1024>}, {transform_indices = @transform_2, window_bounds = array<i64: 1, 1024>}, {transform_indices = @transform_3, window_bounds = array<i64: 128, 1024>}]} {
    %c0 = arith.constant 0 : index
    %c0_0 = arith.constant 0 : index
    %0 = vector.load %arg2[%c0, %c0_0] : memref<128x256xbf16, #tpu.memory_space<vmem>>, vector<128x256xbf16>
    %c0_1 = arith.constant 0 : index
    %c0_2 = arith.constant 0 : index
    %1 = vector.load %arg3[%c0_1, %c0_2] : memref<256x1024xbf16, #tpu.memory_space<vmem>>, vector<256x1024xbf16>
    %cst = arith.constant dense<0.000000e+00> : vector<128x1024xf32>
    %2 = tpu.matmul %0, %1, %cst {dimension_numbers = #tpu.dot_dimension_numbers<[1], [0], [0], [1], [0, 0, 1, 1], [], []>} : vector<128x256xbf16>, vector<256x1024xbf16>, vector<128x1024xf32> -> vector<128x1024xf32>
    %c0_3 = arith.constant 0 : index
    %c0_4 = arith.constant 0 : index
    %3 = vector.load %arg4[%c0_3, %c0_4] : memref<1x1024xf32, #tpu.memory_space<vmem>>, vector<1x1024xf32>
    %4 = vector.broadcast %3 : vector<1x1024xf32> to vector<128x1024xf32>
    %5 = arith.addf %2, %4 : vector<128x1024xf32>
    %c0_5 = arith.constant 0 : index
    %c0_6 = arith.constant 0 : index
    %6 = vector.load %arg5[%c0_5, %c0_6] : memref<128x1024xf32, #tpu.memory_space<vmem>>, vector<128x1024xf32>
    tpu.vector_store %arg5[%c0_5, %c0_6], %5 {strides = array<i32>} : memref<128x1024xf32, #tpu.memory_space<vmem>>, vector<128x1024xf32>,
    return
  }
  func.func @transform_0(%arg0: i32, %arg1: i32) -> (i32, i32) {
    %c0_i32 = arith.constant 0 : i32
    %c0_i32_0 = arith.constant 0 : i32
    return %arg0, %c0_i32 : i32, i32
  }
  func.func @transform_1(%arg0: i32, %arg1: i32) -> (i32, i32) {
    %c0_i32 = arith.constant 0 : i32
    %c0_i32_0 = arith.constant 0 : i32
    return %c0_i32, %arg1 : i32, i32
  }
  func.func @transform_2(%arg0: i32, %arg1: i32) -> (i32, i32) {
    %c0_i32 = arith.constant 0 : i32
    %c0_i32_0 = arith.constant 0 : i32
    return %c0_i32, %arg1 : i32, i32
  }
  func.func @transform_3(%arg0: i32, %arg1: i32) -> (i32, i32) {
    %c0_i32 = arith.constant 0 : i32
    return %arg0, %arg1 : i32, i32
  }
}

</mosaic_0001>

<llo_original>
// kernel: tpu_custom_call.1
$region0: #{tpu_custom_call.1}
  #allocation0 [shape = 'u32[]', space=smem, size = 0x4, offset = 0x4, fixed_abs, tag = 'smem constant byte address 0x4 - core index']
  #allocation1 [shape = 'u32[144,128]{1,0:T(1,128)}', space=vmem, size = 0x12000, scoped, tag = 'internal scratch']
  %s0 = inlined_call_operand.hbm [shape: bf16[128,256], index: 0, kind: input, shape index: {}]
  %s1 = inlined_call_operand.hbm [shape: bf16[256,2048], index: 1, kind: input, shape index: {}]
  %s2 = inlined_call_operand.hbm [shape: f32[1,2048], index: 2, kind: input, shape index: {}]
  %s3 = inlined_call_operand.hbm [shape: f32[128,2048], index: 3, kind: output, shape index: {}]
  %s4 = sld [smem:[#allocation0]]
  $region57: #{tpu_custom_call.1} parent=0
    _
  %s6 = ssub.s32 1, %s4
  %s7 = scalar_select 0, %s6, %s4
  $region1: #{tpu_custom_call.1} parent=0
    #allocation2 [shape = 'u8[65536]{0}', space=vmem, size = 0x10000, scoped, tag = 'input window, operand 0, single buffered']
    #allocation3 [shape = 's32[2]{0}', space=sflag, size = 0x8, scoped, tag = 'scoped memory for tpu_custom_call.1']
    #allocation4 [shape = 's32[2]{0}', space=sflag, size = 0x8, scoped, tag = 'scoped memory for tpu_custom_call.1']
    #allocation5 [shape = 'u8[1048576]{0}', space=vmem, size = 0x100000, scoped, tag = 'input window, operand 1']
    #allocation6 [shape = 's32[2]{0}', space=sflag, size = 0x8, scoped, tag = 'scoped memory for tpu_custom_call.1']
    #allocation7 [shape = 'u8[8192]{0}', space=vmem, size = 0x2000, scoped, tag = 'input window, operand 2']
    #allocation8 [shape = 'u8[1048576]{0}', space=vmem, size = 0x100000, scoped, tag = 'output window, operand 0']
    %8 = vsyncpa [#allocation3], 0
    %9 = vsyncpa [#allocation6], 0
    %s10 = scalar_lea.sflag [#allocation6], 1
    %11 = vsyncpa %s10, 0
    %12 = vsyncpa [#allocation4], 0
    %s13 = scalar_lea.sflag [#allocation4], 1
    %14 = vsyncpa %s13, 0
    loop: start=0, step=1, limit=4
    $region2: #{tpu_custom_call.1} parent=1 // loop_pre_header
      _
    $region3: #{tpu_custom_call.1} parent=1 // loop_header
      %s16 = sphi 0, %s20
      %p17 = scmp.ge.s32.totalorder %s16, 4
      %s23 = sphi 0, %s35
      %s24 = sphi 0, %s31
      %s25 = sphi 0, %s23
      %s26 = sphi 0, %s24
      %s27 = sphi 0, %s25
      %s28 = sphi 0, %s26
      %s38 = sphi 0, %s40
      %s41 = sphi 0, %s38
      %s42 = sphi 0, %s41
      %s58 = sphi 0, %s42
      %s64 = sphi 0, %s66
      %s67 = sphi 0, %s64
      %s68 = sphi 0, %s67
      %s84 = sphi 0, %s68
      %s90 = sphi 0, %s92
      %s93 = sphi 0, %s90
      %s94 = sphi 0, %s93
      %s110 = sphi 0, %s94
      %s118 = sphi 0, %s120
      %s121 = sphi 0, %s118
      %s122 = sphi 0, %s121
      %s138 = sphi 0, %s122
    $region4: #{tpu_custom_call.1} parent=1 // loop_header_branch
      %19 = sbr.rel (%p17) target = $region8
    $region5: #{tpu_custom_call.1} parent=1 // loop_body
      %s21 = ssub.s32 %s16, 1
      %s22 = ssub.s32 %s16, 2
      %s29 = sadd.s32 1, %s24
      %p30 = scmp.ge.s32.totalorder %s29, 2
      %s31 = scalar_select %p30, 0, %s29
      %s32 = sadd.s32 1, %s23
      %s33 = scalar_select %p30, %s32, %s23
      %p34 = scmp.ge.s32.totalorder %s33, 1
      %s35 = scalar_select %p34, 0, %s33
      %s36 = ssub.s32 %s23, %s35
      %p37 = scmp.eq.s32.totalorder %s36, 0
      %s39 = sadd.s32 %s38, 1
      %s40 = scalar_select %p37, %s38, %s39
      %p43 = pneg %p37
      %p44 = scmp.eq.s32.totalorder %s16, 1
      %p45 = por %p43, %p44
      %p46 = scmp.ne.s32.totalorder %s38, %s41
      %p47 = scmp.eq.s32.totalorder %s16, 0
      %p48 = por %p46, %p47
      %p49 = scmp.ne.s32.totalorder %s38, %s41
      %p50 = scmp.eq.s32.totalorder %s21, 1
      %p51 = por %p49, %p50
      %p52 = scmp.ne.s32.totalorder %s41, %s42
      %p53 = scmp.eq.s32.totalorder %s21, 0
      %p54 = por %p52, %p53
      %p55 = scmp.ne.s32.totalorder %s41, %s42
      %p56 = scmp.eq.s32.totalorder %s22, 1
      %p57 = por %p55, %p56
      %p59 = scmp.ne.s32.totalorder %s42, %s58
      %p60 = scmp.eq.s32.totalorder %s22, 0
      %p61 = por %p59, %p60
      %s62 = ssub.s32 %s24, %s31
      %p63 = scmp.eq.s32.totalorder %s62, 0
      %s65 = sadd.s32 %s64, 1
      %s66 = scalar_select %p63, %s64, %s65
      %p69 = pneg %p63
      %p70 = scmp.eq.s32.totalorder %s16, 1
      %p71 = por %p69, %p70
      %p72 = scmp.ne.s32.totalorder %s64, %s67
      %p73 = scmp.eq.s32.totalorder %s16, 0
      %p74 = por %p72, %p73
      %p75 = scmp.ne.s32.totalorder %s64, %s67
      %p76 = scmp.eq.s32.totalorder %s21, 1
      %p77 = por %p75, %p76
      %p78 = scmp.ne.s32.totalorder %s67, %s68
      %p79 = scmp.eq.s32.totalorder %s21, 0
      %p80 = por %p78, %p79
      %p81 = scmp.ne.s32.totalorder %s67, %s68
      %p82 = scmp.eq.s32.totalorder %s22, 1
      %p83 = por %p81, %p82
      %p85 = scmp.ne.s32.totalorder %s68, %s84
      %p86 = scmp.eq.s32.totalorder %s22, 0
      %p87 = por %p85, %p86
      %s88 = ssub.s32 %s24, %s31
      %p89 = scmp.eq.s32.totalorder %s88, 0
      %s91 = sadd.s32 %s90, 1
      %s92 = scalar_select %p89, %s90, %s91
      %p95 = pneg %p89
      %p96 = scmp.eq.s32.totalorder %s16, 1
      %p97 = por %p95, %p96
      %p98 = scmp.ne.s32.totalorder %s90, %s93
      %p99 = scmp.eq.s32.totalorder %s16, 0
      %p100 = por %p98, %p99
      %p101 = scmp.ne.s32.totalorder %s90, %s93
      %p102 = scmp.eq.s32.totalorder %s21, 1
      %p103 = por %p101, %p102
      %p104 = scmp.ne.s32.totalorder %s93, %s94
      %p105 = scmp.eq.s32.totalorder %s21, 0
      %p106 = por %p104, %p105
      %p107 = scmp.ne.s32.totalorder %s93, %s94
      %p108 = scmp.eq.s32.totalorder %s22, 1
      %p109 = por %p107, %p108
      %p111 = scmp.ne.s32.totalorder %s94, %s110
      %p112 = scmp.eq.s32.totalorder %s22, 0
      %p113 = por %p111, %p112
      %s114 = ssub.s32 %s23, %s35
      %s115 = ssub.s32 %s24, %s31
      %s116 = sor.u32 %s114, %s115
      %p117 = scmp.eq.s32.totalorder %s116, 0
      %s119 = sadd.s32 %s118, 1
      %s120 = scalar_select %p117, %s118, %s119
      %p123 = pneg %p117
      %p124 = scmp.eq.s32.totalorder %s16, 1
      %p125 = por %p123, %p124
      %p126 = scmp.ne.s32.totalorder %s118, %s121
      %p127 = scmp.eq.s32.totalorder %s16, 0
      %p128 = por %p126, %p127
      %p129 = scmp.ne.s32.totalorder %s118, %s121
      %p130 = scmp.eq.s32.totalorder %s21, 1
      %p131 = por %p129, %p130
      %p132 = scmp.ne.s32.totalorder %s121, %s122
      %p133 = scmp.eq.s32.totalorder %s21, 0
      %p134 = por %p132, %p133
      %p135 = scmp.ne.s32.totalorder %s121, %s122
      %p136 = scmp.eq.s32.totalorder %s22, 1
      %p137 = por %p135, %p136
      %p139 = scmp.ne.s32.totalorder %s122, %s138
      %p140 = scmp.eq.s32.totalorder %s22, 0
      %p141 = por %p139, %p140
      %p142 = scmp.le.s32.totalorder 1, %s16
      %p143 = scmp.lt.s32.totalorder %s16, 3
      %p144 = pnand %p142, %p143
      %p145 = pneg %p144
      // Predicated region
      $region9: #{tpu_custom_call.1} parent=5 // pred_check
        _
      $region10: #{tpu_custom_call.1} parent=5 // pred_check_branch
        %147 = sbr.rel (%p144) target = $region12
      $region11: #{tpu_custom_call.1} parent=5 // pred_region
        %s148 = ssub.s32 %s16, 1
        // Predicated region
        $region13: #{tpu_custom_call.1} parent=11 // pred_check
          %p149 = pneg %p54
        $region14: #{tpu_custom_call.1} parent=11 // pred_check_branch
          %151 = sbr.rel (%p149) target = $region16
        $region15: #{tpu_custom_call.1} parent=11 // pred_region
          %s152 = smul.u32 16, %s25
          %s154 = ssub.s32 2048, 2048
          %155 = vsyncadd [#allocation3], %s154
          %s156 = smul.addr %s152, 2
          %s157 = smul.addr %s156, 64
          %s158 = scalar_lea.hbm %s0, %s157
          %s159 = sshll.u32 [#allocation2], 4
          %s160 = int_to_ptr.vmem [resolvable:$true] %s159
          %165 = dma.hbm_to_vmem [thread:$0]  %s158, 2048, %s160, [#allocation3], 128, 128, 8
        $region16: #{tpu_custom_call.1} parent=11 // pred_fallthru
          _
      $region12: #{tpu_custom_call.1} parent=5 // pred_fallthru
        _
      %p166 = scmp.lt.s32.totalorder %s16, 2
      // Predicated region
      $region17: #{tpu_custom_call.1} parent=5 // pred_check
        %p167 = pneg %p166
      $region18: #{tpu_custom_call.1} parent=5 // pred_check_branch
        %169 = sbr.rel (%p167) target = $region20
      $region19: #{tpu_custom_call.1} parent=5 // pred_region
        // Predicated region
        $region21: #{tpu_custom_call.1} parent=19 // pred_check
          %p170 = pneg %p74
        $region22: #{tpu_custom_call.1} parent=19 // pred_check_branch
          %172 = sbr.rel (%p170) target = $region24
        $region23: #{tpu_custom_call.1} parent=19 // pred_region
          %s173 = sand.u32 %s16, 1
          %s174 = scalar_lea.sflag [#allocation6], %s173
          %s175 = sand.u32 %s64, 1
          %s176 = smul.addr %s175, 1024
          %s177 = scalar_lea.vmem [#allocation5], %s176
          %s178 = smul.u32 8, %s24
          %s180 = ssub.s32 16384, 16384
          %181 = vsyncadd %s174, %s180
          %s182 = smul.addr %s178, 64
          %s183 = scalar_lea.hbm %s1, %s182
          %s184 = sshll.u32 %s177, 4
          %s185 = int_to_ptr.vmem [resolvable:$true] %s184
          %190 = dma.hbm_to_vmem [thread:$0]  %s183, 16384, %s185, %s174, 1024, 512, 32
        $region24: #{tpu_custom_call.1} parent=19 // pred_fallthru
          _
        // Predicated region
        $region25: #{tpu_custom_call.1} parent=19 // pred_check
          %p191 = pneg %p100
        $region26: #{tpu_custom_call.1} parent=19 // pred_check_branch
          %193 = sbr.rel (%p191) target = $region28
        $region27: #{tpu_custom_call.1} parent=19 // pred_region
          %s194 = sand.u32 %s16, 1
          %s195 = scalar_lea.sflag [#allocation6], %s194
          %s196 = sand.u32 %s90, 1
          %s197 = smul.addr %s196, 8
          %s198 = scalar_lea.vmem [#allocation7], %s197
          %s199 = smul.u32 8, %s24
          %s201 = ssub.s32 128, 128
          %202 = vsyncadd %s195, %s201
          %s203 = smul.addr %s199, 16
          %s204 = scalar_lea.hbm %s2, %s203
          %s206 = sshll.u32 %s198, 4
          %s207 = int_to_ptr.vmem [resolvable:$true] %s206
          %209 = dma.hbm_to_vmem [thread:$0]  %s204, 128, %s207, %s195
        $region28: #{tpu_custom_call.1} parent=19 // pred_fallthru
          _
      $region20: #{tpu_custom_call.1} parent=5 // pred_fallthru
        _
      %p210 = scmp.le.s32.totalorder 1, %s16
      %p211 = scmp.lt.s32.totalorder %s16, 3
      %p212 = pnand %p210, %p211
      %p213 = pneg %p212
      // Predicated region
      $region29: #{tpu_custom_call.1} parent=5 // pred_check
        _
      $region30: #{tpu_custom_call.1} parent=5 // pred_check_branch
        %215 = sbr.rel (%p212) target = $region32
      $region31: #{tpu_custom_call.1} parent=5 // pred_region
        %s216 = ssub.s32 %s16, 1
        // Predicated region
        $region33: #{tpu_custom_call.1} parent=31 // pred_check
          %p217 = pneg %p54
        $region34: #{tpu_custom_call.1} parent=31 // pred_check_branch
          %219 = sbr.rel (%p217) target = $region36
        $region35: #{tpu_custom_call.1} parent=31 // pred_region
          %220 = dma.done [#allocation3], 2048
        $region36: #{tpu_custom_call.1} parent=31 // pred_fallthru
          _
        %s221 = sand.u32 %s21, 1
        %s222 = scalar_lea.sflag [#allocation6], %s221
        %s223 = sand.u32 %s67, 1
        %s224 = smul.addr %s223, 1024
        %s225 = scalar_lea.vmem [#allocation5], %s224
        // Predicated region
        $region37: #{tpu_custom_call.1} parent=31 // pred_check
          %p226 = pneg %p80
        $region38: #{tpu_custom_call.1} parent=31 // pred_check_branch
          %228 = sbr.rel (%p226) target = $region40
        $region39: #{tpu_custom_call.1} parent=31 // pred_region
          %229 = dma.done %s222, 16384
        $region40: #{tpu_custom_call.1} parent=31 // pred_fallthru
          _
        %s230 = sand.u32 %s21, 1
        %s231 = scalar_lea.sflag [#allocation6], %s230
        %s232 = sand.u32 %s93, 1
        %s233 = smul.addr %s232, 8
        %s234 = scalar_lea.vmem [#allocation7], %s233
        // Predicated region
        $region41: #{tpu_custom_call.1} parent=31 // pred_check
          %p235 = pneg %p106
        $region42: #{tpu_custom_call.1} parent=31 // pred_check_branch
          %237 = sbr.rel (%p235) target = $region44
        $region43: #{tpu_custom_call.1} parent=31 // pred_region
          %238 = dma.done %s231, 128
        $region44: #{tpu_custom_call.1} parent=31 // pred_fallthru
          _
        %p239 = pneg %p54
        %p240 = pneg %p51
        %s241 = sand.u32 %s21, 1
        %s242 = scalar_lea.sflag [#allocation6], %s241
        %s243 = sand.u32 %s67, 1
        %s244 = smul.addr %s243, 1024
        %s245 = scalar_lea.vmem [#allocation5], %s244
        %p246 = pneg %p80
        %p247 = pneg %p77
        %s248 = sand.u32 %s21, 1
        %s249 = scalar_lea.sflag [#allocation6], %s248
        %s250 = sand.u32 %s93, 1
        %s251 = smul.addr %s250, 8
        %s252 = scalar_lea.vmem [#allocation7], %s251
        %p253 = pneg %p106
        %p254 = pneg %p103
        %p255 = pneg %p134
        %p256 = pneg %p131
        %s257 = sand.u32 %s121, 1
        %s258 = scalar_lea.sflag [#allocation4], %s257
        %s259 = sand.u32 %s121, 1
        %s260 = smul.addr %s259, 1024
        %s261 = scalar_lea.vmem [#allocation8], %s260
        %s262 = smul.u32 16, %s25
        %s263 = smul.u32 8, %s26
        %s264 = smul.u32 8, %s26
        %s265 = smul.u32 16, %s25
        %s266 = smul.u32 8, %s26
        %v267 = vld [vmem:[#allocation2] sm:$0xff]
        %v268 = vld [vmem:[#allocation2 + $0x8] sm:$0xff]
        %v269 = vld [vmem:[#allocation2 + $0x10] sm:$0xff]
        %v270 = vld [vmem:[#allocation2 + $0x18] sm:$0xff]
        %v271 = vld [vmem:[#allocation2 + $0x20] sm:$0xff]
        %v272 = vld [vmem:[#allocation2 + $0x28] sm:$0xff]
        %v273 = vld [vmem:[#allocation2 + $0x30] sm:$0xff]
        %v274 = vld [vmem:[#allocation2 + $0x38] sm:$0xff]
        %v275 = vld [vmem:[#allocation2 + $0x40] sm:$0xff]
        %v276 = vld [vmem:[#allocation2 + $0x48] sm:$0xff]
        %v277 = vld [vmem:[#allocation2 + $0x50] sm:$0xff]
        %v278 = vld [vmem:[#allocation2 + $0x58] sm:$0xff]
        %v279 = vld [vmem:[#allocation2 + $0x60] sm:$0xff]
        %v280 = vld [vmem:[#allocation2 + $0x68] sm:$0xff]
        %v281 = vld [vmem:[#allocation2 + $0x70] sm:$0xff]
        %v282 = vld [vmem:[#allocation2 + $0x78] sm:$0xff]
        %v283 = vld [vmem:[%s225] sm:$0xff]
        %v284 = vld [vmem:[%s225 + $0x8] sm:$0xff]
        %v285 = vld [vmem:[%s225 + $0x10] sm:$0xff]
        %v286 = vld [vmem:[%s225 + $0x18] sm:$0xff]
        %v287 = vld [vmem:[%s225 + $0x20] sm:$0xff]
        %v288 = vld [vmem:[%s225 + $0x28] sm:$0xff]
        %v289 = vld [vmem:[%s225 + $0x30] sm:$0xff]
        %v290 = vld [vmem:[%s225 + $0x38] sm:$0xff]
        %v291 = vld [vmem:[%s225 + $0x40] sm:$0xff]
        %v292 = vld [vmem:[%s225 + $0x48] sm:$0xff]
        %v293 = vld [vmem:[%s225 + $0x50] sm:$0xff]
        %v294 = vld [vmem:[%s225 + $0x58] sm:$0xff]
        %v295 = vld [vmem:[%s225 + $0x60] sm:$0xff]
        %v296 = vld [vmem:[%s225 + $0x68] sm:$0xff]
        %v297 = vld [vmem:[%s225 + $0x70] sm:$0xff]
        %v298 = vld [vmem:[%s225 + $0x78] sm:$0xff]
        %v299 = vld [vmem:[%s225 + $0x80] sm:$0xff]
        %v300 = vld [vmem:[%s225 + $0x88] sm:$0xff]
        %v301 = vld [vmem:[%s225 + $0x90] sm:$0xff]
        %v302 = vld [vmem:[%s225 + $0x98] sm:$0xff]
        %v303 = vld [vmem:[%s225 + $0xa0] sm:$0xff]
        %v304 = vld [vmem:[%s225 + $0xa8] sm:$0xff]
        %v305 = vld [vmem:[%s225 + $0xb0] sm:$0xff]
        %v306 = vld [vmem:[%s225 + $0xb8] sm:$0xff]
        %v307 = vld [vmem:[%s225 + $0xc0] sm:$0xff]
        %v308 = vld [vmem:[%s225 + $0xc8] sm:$0xff]
        %v309 = vld [vmem:[%s225 + $0xd0] sm:$0xff]
        %v310 = vld [vmem:[%s225 + $0xd8] sm:$0xff]
        %v311 = vld [vmem:[%s225 + $0xe0] sm:$0xff]
        %v312 = vld [vmem:[%s225 + $0xe8] sm:$0xff]
        %v313 = vld [vmem:[%s225 + $0xf0] sm:$0xff]
        %v314 = vld [vmem:[%s225 + $0xf8] sm:$0xff]
        %v315 = vld [vmem:[%s225 + $0x100] sm:$0xff]
        %v316 = vld [vmem:[%s225 + $0x108] sm:$0xff]
        %v317 = vld [vmem:[%s225 + $0x110] sm:$0xff]
        %v318 = vld [vmem:[%s225 + $0x118] sm:$0xff]
        %v319 = vld [vmem:[%s225 + $0x120] sm:$0xff]
        %v320 = vld [vmem:[%s225 + $0x128] sm:$0xff]
        %v321 = vld [vmem:[%s225 + $0x130] sm:$0xff]
        %v322 = vld [vmem:[%s225 + $0x138] sm:$0xff]
        %v323 = vld [vmem:[%s225 + $0x140] sm:$0xff]
        %v324 = vld [vmem:[%s225 + $0x148] sm:$0xff]
        %v325 = vld [vmem:[%s225 + $0x150] sm:$0xff]
        %v326 = vld [vmem:[%s225 + $0x158] sm:$0xff]
        %v327 = vld [vmem:[%s225 + $0x160] sm:$0xff]
        %v328 = vld [vmem:[%s225 + $0x168] sm:$0xff]
        %v329 = vld [vmem:[%s225 + $0x170] sm:$0xff]
        %v330 = vld [vmem:[%s225 + $0x178] sm:$0xff]
        %v331 = vld [vmem:[%s225 + $0x180] sm:$0xff]
        %v332 = vld [vmem:[%s225 + $0x188] sm:$0xff]
        %v333 = vld [vmem:[%s225 + $0x190] sm:$0xff]
        %v334 = vld [vmem:[%s225 + $0x198] sm:$0xff]
        %v335 = vld [vmem:[%s225 + $0x1a0] sm:$0xff]
        %v336 = vld [vmem:[%s225 + $0x1a8] sm:$0xff]
        %v337 = vld [vmem:[%s225 + $0x1b0] sm:$0xff]
        %v338 = vld [vmem:[%s225 + $0x1b8] sm:$0xff]
        %v339 = vld [vmem:[%s225 + $0x1c0] sm:$0xff]
        %v340 = vld [vmem:[%s225 + $0x1c8] sm:$0xff]
        %v341 = vld [vmem:[%s225 + $0x1d0] sm:$0xff]
        %v342 = vld [vmem:[%s225 + $0x1d8] sm:$0xff]
        %v343 = vld [vmem:[%s225 + $0x1e0] sm:$0xff]
        %v344 = vld [vmem:[%s225 + $0x1e8] sm:$0xff]
        %v345 = vld [vmem:[%s225 + $0x1f0] sm:$0xff]
        %v346 = vld [vmem:[%s225 + $0x1f8] sm:$0xff]
        %v347 = vld [vmem:[%s225 + $0x200] sm:$0xff]
        %v348 = vld [vmem:[%s225 + $0x208] sm:$0xff]
        %v349 = vld [vmem:[%s225 + $0x210] sm:$0xff]
        %v350 = vld [vmem:[%s225 + $0x218] sm:$0xff]
        %v351 = vld [vmem:[%s225 + $0x220] sm:$0xff]
        %v352 = vld [vmem:[%s225 + $0x228] sm:$0xff]
        %v353 = vld [vmem:[%s225 + $0x230] sm:$0xff]
        %v354 = vld [vmem:[%s225 + $0x238] sm:$0xff]
        %v355 = vld [vmem:[%s225 + $0x240] sm:$0xff]
        %v356 = vld [vmem:[%s225 + $0x248] sm:$0xff]
        %v357 = vld [vmem:[%s225 + $0x250] sm:$0xff]
        %v358 = vld [vmem:[%s225 + $0x258] sm:$0xff]
        %v359 = vld [vmem:[%s225 + $0x260] sm:$0xff]
        %v360 = vld [vmem:[%s225 + $0x268] sm:$0xff]
        %v361 = vld [vmem:[%s225 + $0x270] sm:$0xff]
        %v362 = vld [vmem:[%s225 + $0x278] sm:$0xff]
        %v363 = vld [vmem:[%s225 + $0x280] sm:$0xff]
        %v364 = vld [vmem:[%s225 + $0x288] sm:$0xff]
        %v365 = vld [vmem:[%s225 + $0x290] sm:$0xff]
        %v366 = vld [vmem:[%s225 + $0x298] sm:$0xff]
        %v367 = vld [vmem:[%s225 + $0x2a0] sm:$0xff]
        %v368 = vld [vmem:[%s225 + $0x2a8] sm:$0xff]
        %v369 = vld [vmem:[%s225 + $0x2b0] sm:$0xff]
        %v370 = vld [vmem:[%s225 + $0x2b8] sm:$0xff]
        %v371 = vld [vmem:[%s225 + $0x2c0] sm:$0xff]
        %v372 = vld [vmem:[%s225 + $0x2c8] sm:$0xff]
        %v373 = vld [vmem:[%s225 + $0x2d0] sm:$0xff]
        %v374 = vld [vmem:[%s225 + $0x2d8] sm:$0xff]
        %v375 = vld [vmem:[%s225 + $0x2e0] sm:$0xff]
        %v376 = vld [vmem:[%s225 + $0x2e8] sm:$0xff]
        %v377 = vld [vmem:[%s225 + $0x2f0] sm:$0xff]
        %v378 = vld [vmem:[%s225 + $0x2f8] sm:$0xff]
        %v379 = vld [vmem:[%s225 + $0x300] sm:$0xff]
        %v380 = vld [vmem:[%s225 + $0x308] sm:$0xff]
        %v381 = vld [vmem:[%s225 + $0x310] sm:$0xff]
        %v382 = vld [vmem:[%s225 + $0x318] sm:$0xff]
        %v383 = vld [vmem:[%s225 + $0x320] sm:$0xff]
        %v384 = vld [vmem:[%s225 + $0x328] sm:$0xff]
        %v385 = vld [vmem:[%s225 + $0x330] sm:$0xff]
        %v386 = vld [vmem:[%s225 + $0x338] sm:$0xff]
        %v387 = vld [vmem:[%s225 + $0x340] sm:$0xff]
        %v388 = vld [vmem:[%s225 + $0x348] sm:$0xff]
        %v389 = vld [vmem:[%s225 + $0x350] sm:$0xff]
        %v390 = vld [vmem:[%s225 + $0x358] sm:$0xff]
        %v391 = vld [vmem:[%s225 + $0x360] sm:$0xff]
        %v392 = vld [vmem:[%s225 + $0x368] sm:$0xff]
        %v393 = vld [vmem:[%s225 + $0x370] sm:$0xff]
        %v394 = vld [vmem:[%s225 + $0x378] sm:$0xff]
        %v395 = vld [vmem:[%s225 + $0x380] sm:$0xff]
        %v396 = vld [vmem:[%s225 + $0x388] sm:$0xff]
        %v397 = vld [vmem:[%s225 + $0x390] sm:$0xff]
        %v398 = vld [vmem:[%s225 + $0x398] sm:$0xff]
        %v399 = vld [vmem:[%s225 + $0x3a0] sm:$0xff]
        %v400 = vld [vmem:[%s225 + $0x3a8] sm:$0xff]
        %v401 = vld [vmem:[%s225 + $0x3b0] sm:$0xff]
        %v402 = vld [vmem:[%s225 + $0x3b8] sm:$0xff]
        %v403 = vld [vmem:[%s225 + $0x3c0] sm:$0xff]
        %v404 = vld [vmem:[%s225 + $0x3c8] sm:$0xff]
        %v405 = vld [vmem:[%s225 + $0x3d0] sm:$0xff]
        %v406 = vld [vmem:[%s225 + $0x3d8] sm:$0xff]
        %v407 = vld [vmem:[%s225 + $0x3e0] sm:$0xff]
        %v408 = vld [vmem:[%s225 + $0x3e8] sm:$0xff]
        %v409 = vld [vmem:[%s225 + $0x3f0] sm:$0xff]
        %v410 = vld [vmem:[%s225 + $0x3f8] sm:$0xff]
        %v411 = vld [vmem:[%s234] sm:$0xff]
        %v413 = vlaneseq
        %v414 = vshrl.u32 %v413, 7
        %v415 = vsub.s32 0, %v414
        %v416 = vrot.slane %v411, %v415
        %v417 = vlaneseq
        %v418 = vshrl.u32 %v417, 7
        %v419 = vsub.s32 1, %v418
        %v420 = vrot.slane %v411, %v419
        %v421 = vlaneseq
        %v422 = vshrl.u32 %v421, 7
        %v423 = vsub.s32 2, %v422
        %v424 = vrot.slane %v411, %v423
        %v425 = vlaneseq
        %v426 = vshrl.u32 %v425, 7
        %v427 = vsub.s32 3, %v426
        %v428 = vrot.slane %v411, %v427
        %v429 = vlaneseq
        %v430 = vshrl.u32 %v429, 7
        %v431 = vsub.s32 4, %v430
        %v432 = vrot.slane %v411, %v431
        %v433 = vlaneseq
        %v434 = vshrl.u32 %v433, 7
        %v435 = vsub.s32 5, %v434
        %v436 = vrot.slane %v411, %v435
        %v437 = vlaneseq
        %v438 = vshrl.u32 %v437, 7
        %v439 = vsub.s32 6, %v438
        %v440 = vrot.slane %v411, %v439
        %v441 = vlaneseq
        %v442 = vshrl.u32 %v441, 7
        %v443 = vsub.s32 7, %v442
        %v444 = vrot.slane %v411, %v443
        %v469 = vunpack.c.l.b16 %v267
        %v470 = vunpack.c.h.b16 %v267
        %v471 = vunpack.c.l.b16 %v268
        %v472 = vunpack.c.h.b16 %v268
        %v473 = vunpack.c.l.b16 %v269
        %v474 = vunpack.c.h.b16 %v269
        %v475 = vunpack.c.l.b16 %v270
        %v476 = vunpack.c.h.b16 %v270
        %v477 = vunpack.c.l.b16 %v271
        %v478 = vunpack.c.h.b16 %v271
        %v479 = vunpack.c.l.b16 %v272
        %v480 = vunpack.c.h.b16 %v272
        %v481 = vunpack.c.l.b16 %v273
        %v482 = vunpack.c.h.b16 %v273
        %v483 = vunpack.c.l.b16 %v274
        %v484 = vunpack.c.h.b16 %v274
        %v485 = vunpack.c.l.b16 %v275
        %v486 = vunpack.c.h.b16 %v275
        %v487 = vunpack.c.l.b16 %v276
        %v488 = vunpack.c.h.b16 %v276
        %v489 = vunpack.c.l.b16 %v277
        %v490 = vunpack.c.h.b16 %v277
        %v491 = vunpack.c.l.b16 %v278
        %v492 = vunpack.c.h.b16 %v278
        %v493 = vunpack.c.l.b16 %v279
        %v494 = vunpack.c.h.b16 %v279
        %v495 = vunpack.c.l.b16 %v280
        %v496 = vunpack.c.h.b16 %v280
        %v497 = vunpack.c.l.b16 %v281
        %v498 = vunpack.c.h.b16 %v281
        %v499 = vunpack.c.l.b16 %v282
        %v500 = vunpack.c.h.b16 %v282
        %v501 = vpack.c.b16 %v471, %v469
        %v502 = vpack.c.b16 %v472, %v470
        %v503 = vpack.c.b16 %v475, %v473
        %v504 = vpack.c.b16 %v476, %v474
        %v505 = vpack.c.b16 %v479, %v477
        %v506 = vpack.c.b16 %v480, %v478
        %v507 = vpack.c.b16 %v483, %v481
        %v508 = vpack.c.b16 %v484, %v482
        %v509 = vpack.c.b16 %v487, %v485
        %v510 = vpack.c.b16 %v488, %v486
        %v511 = vpack.c.b16 %v491, %v489
        %v512 = vpack.c.b16 %v492, %v490
        %v513 = vpack.c.b16 %v495, %v493
        %v514 = vpack.c.b16 %v496, %v494
        %v515 = vpack.c.b16 %v499, %v497
        %v516 = vpack.c.b16 %v500, %v498
        %v661 = vunpack.c.l.b16 %v283
        %v662 = vunpack.c.h.b16 %v283
        %v663 = vunpack.c.l.b16 %v284
        %v664 = vunpack.c.h.b16 %v284
        %v665 = vunpack.c.l.b16 %v285
        %v666 = vunpack.c.h.b16 %v285
        %v667 = vunpack.c.l.b16 %v286
        %v668 = vunpack.c.h.b16 %v286
        %v669 = vunpack.c.l.b16 %v287
        %v670 = vunpack.c.h.b16 %v287
        %v671 = vunpack.c.l.b16 %v288
        %v672 = vunpack.c.h.b16 %v288
        %v673 = vunpack.c.l.b16 %v289
        %v674 = vunpack.c.h.b16 %v289
        %v675 = vunpack.c.l.b16 %v290
        %v676 = vunpack.c.h.b16 %v290
        %v677 = vunpack.c.l.b16 %v291
        %v678 = vunpack.c.h.b16 %v291
        %v679 = vunpack.c.l.b16 %v292
        %v680 = vunpack.c.h.b16 %v292
        %v681 = vunpack.c.l.b16 %v293
        %v682 = vunpack.c.h.b16 %v293
        %v683 = vunpack.c.l.b16 %v294
        %v684 = vunpack.c.h.b16 %v294
        %v685 = vunpack.c.l.b16 %v295
        %v686 = vunpack.c.h.b16 %v295
        %v687 = vunpack.c.l.b16 %v296
        %v688 = vunpack.c.h.b16 %v296
        %v689 = vunpack.c.l.b16 %v297
        %v690 = vunpack.c.h.b16 %v297
        %v691 = vunpack.c.l.b16 %v298
        %v692 = vunpack.c.h.b16 %v298
        %v693 = vunpack.c.l.b16 %v299
        %v694 = vunpack.c.h.b16 %v299
        %v695 = vunpack.c.l.b16 %v300
        %v696 = vunpack.c.h.b16 %v300
        %v697 = vunpack.c.l.b16 %v301
        %v698 = vunpack.c.h.b16 %v301
        %v699 = vunpack.c.l.b16 %v302
        %v700 = vunpack.c.h.b16 %v302
        %v701 = vunpack.c.l.b16 %v303
        %v702 = vunpack.c.h.b16 %v303
        %v703 = vunpack.c.l.b16 %v304
        %v704 = vunpack.c.h.b16 %v304
        %v705 = vunpack.c.l.b16 %v305
        %v706 = vunpack.c.h.b16 %v305
        %v707 = vunpack.c.l.b16 %v306
        %v708 = vunpack.c.h.b16 %v306
        %v709 = vunpack.c.l.b16 %v307
        %v710 = vunpack.c.h.b16 %v307
        %v711 = vunpack.c.l.b16 %v308
        %v712 = vunpack.c.h.b16 %v308
        %v713 = vunpack.c.l.b16 %v309
        %v714 = vunpack.c.h.b16 %v309
        %v715 = vunpack.c.l.b16 %v310
        %v716 = vunpack.c.h.b16 %v310
        %v717 = vunpack.c.l.b16 %v311
        %v718 = vunpack.c.h.b16 %v311
        %v719 = vunpack.c.l.b16 %v312
        %v720 = vunpack.c.h.b16 %v312
        %v721 = vunpack.c.l.b16 %v313
        %v722 = vunpack.c.h.b16 %v313
        %v723 = vunpack.c.l.b16 %v314
        %v724 = vunpack.c.h.b16 %v314
        %v725 = vunpack.c.l.b16 %v315
        %v726 = vunpack.c.h.b16 %v315
        %v727 = vunpack.c.l.b16 %v316
        %v728 = vunpack.c.h.b16 %v316
        %v729 = vunpack.c.l.b16 %v317
        %v730 = vunpack.c.h.b16 %v317
        %v731 = vunpack.c.l.b16 %v318
        %v732 = vunpack.c.h.b16 %v318
        %v733 = vunpack.c.l.b16 %v319
        %v734 = vunpack.c.h.b16 %v319
        %v735 = vunpack.c.l.b16 %v320
        %v736 = vunpack.c.h.b16 %v320
        %v737 = vunpack.c.l.b16 %v321
        %v738 = vunpack.c.h.b16 %v321
        %v739 = vunpack.c.l.b16 %v322
        %v740 = vunpack.c.h.b16 %v322
        %v741 = vunpack.c.l.b16 %v323
        %v742 = vunpack.c.h.b16 %v323
        %v743 = vunpack.c.l.b16 %v324
        %v744 = vunpack.c.h.b16 %v324
        %v745 = vunpack.c.l.b16 %v325
        %v746 = vunpack.c.h.b16 %v325
        %v747 = vunpack.c.l.b16 %v326
        %v748 = vunpack.c.h.b16 %v326
        %v749 = vunpack.c.l.b16 %v327
        %v750 = vunpack.c.h.b16 %v327
        %v751 = vunpack.c.l.b16 %v328
        %v752 = vunpack.c.h.b16 %v328
        %v753 = vunpack.c.l.b16 %v329
        %v754 = vunpack.c.h.b16 %v329
        %v755 = vunpack.c.l.b16 %v330
        %v756 = vunpack.c.h.b16 %v330
        %v757 = vunpack.c.l.b16 %v331
        %v758 = vunpack.c.h.b16 %v331
        %v759 = vunpack.c.l.b16 %v332
        %v760 = vunpack.c.h.b16 %v332
        %v761 = vunpack.c.l.b16 %v333
        %v762 = vunpack.c.h.b16 %v333
        %v763 = vunpack.c.l.b16 %v334
        %v764 = vunpack.c.h.b16 %v334
        %v765 = vunpack.c.l.b16 %v335
        %v766 = vunpack.c.h.b16 %v335
        %v767 = vunpack.c.l.b16 %v336
        %v768 = vunpack.c.h.b16 %v336
        %v769 = vunpack.c.l.b16 %v337
        %v770 = vunpack.c.h.b16 %v337
        %v771 = vunpack.c.l.b16 %v338
        %v772 = vunpack.c.h.b16 %v338
        %v773 = vunpack.c.l.b16 %v339
        %v774 = vunpack.c.h.b16 %v339
        %v775 = vunpack.c.l.b16 %v340
        %v776 = vunpack.c.h.b16 %v340
        %v777 = vunpack.c.l.b16 %v341
        %v778 = vunpack.c.h.b16 %v341
        %v779 = vunpack.c.l.b16 %v342
        %v780 = vunpack.c.h.b16 %v342
        %v781 = vunpack.c.l.b16 %v343
        %v782 = vunpack.c.h.b16 %v343
        %v783 = vunpack.c.l.b16 %v344
        %v784 = vunpack.c.h.b16 %v344
        %v785 = vunpack.c.l.b16 %v345
        %v786 = vunpack.c.h.b16 %v345
        %v787 = vunpack.c.l.b16 %v346
        %v788 = vunpack.c.h.b16 %v346
        %v789 = vunpack.c.l.b16 %v347
        %v790 = vunpack.c.h.b16 %v347
        %v791 = vunpack.c.l.b16 %v348
        %v792 = vunpack.c.h.b16 %v348
        %v793 = vunpack.c.l.b16 %v349
        %v794 = vunpack.c.h.b16 %v349
        %v795 = vunpack.c.l.b16 %v350
        %v796 = vunpack.c.h.b16 %v350
        %v797 = vunpack.c.l.b16 %v351
        %v798 = vunpack.c.h.b16 %v351
        %v799 = vunpack.c.l.b16 %v352
        %v800 = vunpack.c.h.b16 %v352
        %v801 = vunpack.c.l.b16 %v353
        %v802 = vunpack.c.h.b16 %v353
        %v803 = vunpack.c.l.b16 %v354
        %v804 = vunpack.c.h.b16 %v354
        %v805 = vunpack.c.l.b16 %v355
        %v806 = vunpack.c.h.b16 %v355
        %v807 = vunpack.c.l.b16 %v356
        %v808 = vunpack.c.h.b16 %v356
        %v809 = vunpack.c.l.b16 %v357
        %v810 = vunpack.c.h.b16 %v357
        %v811 = vunpack.c.l.b16 %v358
        %v812 = vunpack.c.h.b16 %v358
        %v813 = vunpack.c.l.b16 %v359
        %v814 = vunpack.c.h.b16 %v359
        %v815 = vunpack.c.l.b16 %v360
        %v816 = vunpack.c.h.b16 %v360
        %v817 = vunpack.c.l.b16 %v361
        %v818 = vunpack.c.h.b16 %v361
        %v819 = vunpack.c.l.b16 %v362
        %v820 = vunpack.c.h.b16 %v362
        %v821 = vunpack.c.l.b16 %v363
        %v822 = vunpack.c.h.b16 %v363
        %v823 = vunpack.c.l.b16 %v364
        %v824 = vunpack.c.h.b16 %v364
        %v825 = vunpack.c.l.b16 %v365
        %v826 = vunpack.c.h.b16 %v365
        %v827 = vunpack.c.l.b16 %v366
        %v828 = vunpack.c.h.b16 %v366
        %v829 = vunpack.c.l.b16 %v367
        %v830 = vunpack.c.h.b16 %v367
        %v831 = vunpack.c.l.b16 %v368
        %v832 = vunpack.c.h.b16 %v368
        %v833 = vunpack.c.l.b16 %v369
        %v834 = vunpack.c.h.b16 %v369
        %v835 = vunpack.c.l.b16 %v370
        %v836 = vunpack.c.h.b16 %v370
        %v837 = vunpack.c.l.b16 %v371
        %v838 = vunpack.c.h.b16 %v371
        %v839 = vunpack.c.l.b16 %v372
        %v840 = vunpack.c.h.b16 %v372
        %v841 = vunpack.c.l.b16 %v373
        %v842 = vunpack.c.h.b16 %v373
        %v843 = vunpack.c.l.b16 %v374
        %v844 = vunpack.c.h.b16 %v374
        %v845 = vunpack.c.l.b16 %v375
        %v846 = vunpack.c.h.b16 %v375
        %v847 = vunpack.c.l.b16 %v376
        %v848 = vunpack.c.h.b16 %v376
        %v849 = vunpack.c.l.b16 %v377
        %v850 = vunpack.c.h.b16 %v377
        %v851 = vunpack.c.l.b16 %v378
        %v852 = vunpack.c.h.b16 %v378
        %v853 = vunpack.c.l.b16 %v379
        %v854 = vunpack.c.h.b16 %v379
        %v855 = vunpack.c.l.b16 %v380
        %v856 = vunpack.c.h.b16 %v380
        %v857 = vunpack.c.l.b16 %v381
        %v858 = vunpack.c.h.b16 %v381
        %v859 = vunpack.c.l.b16 %v382
        %v860 = vunpack.c.h.b16 %v382
        %v861 = vunpack.c.l.b16 %v383
        %v862 = vunpack.c.h.b16 %v383
        %v863 = vunpack.c.l.b16 %v384
        %v864 = vunpack.c.h.b16 %v384
        %v865 = vunpack.c.l.b16 %v385
        %v866 = vunpack.c.h.b16 %v385
        %v867 = vunpack.c.l.b16 %v386
        %v868 = vunpack.c.h.b16 %v386
        %v869 = vunpack.c.l.b16 %v387
        %v870 = vunpack.c.h.b16 %v387
        %v871 = vunpack.c.l.b16 %v388
        %v872 = vunpack.c.h.b16 %v388
        %v873 = vunpack.c.l.b16 %v389
        %v874 = vunpack.c.h.b16 %v389
        %v875 = vunpack.c.l.b16 %v390
        %v876 = vunpack.c.h.b16 %v390
        %v877 = vunpack.c.l.b16 %v391
        %v878 = vunpack.c.h.b16 %v391
        %v879 = vunpack.c.l.b16 %v392
        %v880 = vunpack.c.h.b16 %v392
        %v881 = vunpack.c.l.b16 %v393
        %v882 = vunpack.c.h.b16 %v393
        %v883 = vunpack.c.l.b16 %v394
        %v884 = vunpack.c.h.b16 %v394
        %v885 = vunpack.c.l.b16 %v395
        %v886 = vunpack.c.h.b16 %v395
        %v887 = vunpack.c.l.b16 %v396
        %v888 = vunpack.c.h.b16 %v396
        %v889 = vunpack.c.l.b16 %v397
        %v890 = vunpack.c.h.b16 %v397
        %v891 = vunpack.c.l.b16 %v398
        %v892 = vunpack.c.h.b16 %v398
        %v893 = vunpack.c.l.b16 %v399
        %v894 = vunpack.c.h.b16 %v399
        %v895 = vunpack.c.l.b16 %v400
        %v896 = vunpack.c.h.b16 %v400
        %v897 = vunpack.c.l.b16 %v401
        %v898 = vunpack.c.h.b16 %v401
        %v899 = vunpack.c.l.b16 %v402
        %v900 = vunpack.c.h.b16 %v402
        %v901 = vunpack.c.l.b16 %v403
        %v902 = vunpack.c.h.b16 %v403
        %v903 = vunpack.c.l.b16 %v404
        %v904 = vunpack.c.h.b16 %v404
        %v905 = vunpack.c.l.b16 %v405
        %v906 = vunpack.c.h.b16 %v405
        %v907 = vunpack.c.l.b16 %v406
        %v908 = vunpack.c.h.b16 %v406
        %v909 = vunpack.c.l.b16 %v407
        %v910 = vunpack.c.h.b16 %v407
        %v911 = vunpack.c.l.b16 %v408
        %v912 = vunpack.c.h.b16 %v408
        %v913 = vunpack.c.l.b16 %v409
        %v914 = vunpack.c.h.b16 %v409
        %v915 = vunpack.c.l.b16 %v410
        %v916 = vunpack.c.h.b16 %v410
        %v917 = vpack.c.b16 %v669, %v661
        %v918 = vpack.c.b16 %v670, %v662
        %v919 = vpack.c.b16 %v671, %v663
        %v920 = vpack.c.b16 %v672, %v664
        %v921 = vpack.c.b16 %v673, %v665
        %v922 = vpack.c.b16 %v674, %v666
        %v923 = vpack.c.b16 %v675, %v667
        %v924 = vpack.c.b16 %v676, %v668
        %v925 = vpack.c.b16 %v685, %v677
        %v926 = vpack.c.b16 %v686, %v678
        %v927 = vpack.c.b16 %v687, %v679
        %v928 = vpack.c.b16 %v688, %v680
        %v929 = vpack.c.b16 %v689, %v681
        %v930 = vpack.c.b16 %v690, %v682
        %v931 = vpack.c.b16 %v691, %v683
        %v932 = vpack.c.b16 %v692, %v684
        %v933 = vpack.c.b16 %v701, %v693
        %v934 = vpack.c.b16 %v702, %v694
        %v935 = vpack.c.b16 %v703, %v695
        %v936 = vpack.c.b16 %v704, %v696
        %v937 = vpack.c.b16 %v705, %v697
        %v938 = vpack.c.b16 %v706, %v698
        %v939 = vpack.c.b16 %v707, %v699
        %v940 = vpack.c.b16 %v708, %v700
        %v941 = vpack.c.b16 %v717, %v709
        %v942 = vpack.c.b16 %v718, %v710
        %v943 = vpack.c.b16 %v719, %v711
        %v944 = vpack.c.b16 %v720, %v712
        %v945 = vpack.c.b16 %v721, %v713
        %v946 = vpack.c.b16 %v722, %v714
        %v947 = vpack.c.b16 %v723, %v715
        %v948 = vpack.c.b16 %v724, %v716
        %v949 = vpack.c.b16 %v733, %v725
        %v950 = vpack.c.b16 %v734, %v726
        %v951 = vpack.c.b16 %v735, %v727
        %v952 = vpack.c.b16 %v736, %v728
        %v953 = vpack.c.b16 %v737, %v729
        %v954 = vpack.c.b16 %v738, %v730
        %v955 = vpack.c.b16 %v739, %v731
        %v956 = vpack.c.b16 %v740, %v732
        %v957 = vpack.c.b16 %v749, %v741
        %v958 = vpack.c.b16 %v750, %v742
        %v959 = vpack.c.b16 %v751, %v743
        %v960 = vpack.c.b16 %v752, %v744
        %v961 = vpack.c.b16 %v753, %v745
        %v962 = vpack.c.b16 %v754, %v746
        %v963 = vpack.c.b16 %v755, %v747
        %v964 = vpack.c.b16 %v756, %v748
        %v965 = vpack.c.b16 %v765, %v757
        %v966 = vpack.c.b16 %v766, %v758
        %v967 = vpack.c.b16 %v767, %v759
        %v968 = vpack.c.b16 %v768, %v760
        %v969 = vpack.c.b16 %v769, %v761
        %v970 = vpack.c.b16 %v770, %v762
        %v971 = vpack.c.b16 %v771, %v763
        %v972 = vpack.c.b16 %v772, %v764
        %v973 = vpack.c.b16 %v781, %v773
        %v974 = vpack.c.b16 %v782, %v774
        %v975 = vpack.c.b16 %v783, %v775
        %v976 = vpack.c.b16 %v784, %v776
        %v977 = vpack.c.b16 %v785, %v777
        %v978 = vpack.c.b16 %v786, %v778
        %v979 = vpack.c.b16 %v787, %v779
        %v980 = vpack.c.b16 %v788, %v780
        %v981 = vpack.c.b16 %v797, %v789
        %v982 = vpack.c.b16 %v798, %v790
        %v983 = vpack.c.b16 %v799, %v791
        %v984 = vpack.c.b16 %v800, %v792
        %v985 = vpack.c.b16 %v801, %v793
        %v986 = vpack.c.b16 %v802, %v794
        %v987 = vpack.c.b16 %v803, %v795
        %v988 = vpack.c.b16 %v804, %v796
        %v989 = vpack.c.b16 %v813, %v805
        %v990 = vpack.c.b16 %v814, %v806
        %v991 = vpack.c.b16 %v815, %v807
        %v992 = vpack.c.b16 %v816, %v808
        %v993 = vpack.c.b16 %v817, %v809
        %v994 = vpack.c.b16 %v818, %v810
        %v995 = vpack.c.b16 %v819, %v811
        %v996 = vpack.c.b16 %v820, %v812
        %v997 = vpack.c.b16 %v829, %v821
        %v998 = vpack.c.b16 %v830, %v822
        %v999 = vpack.c.b16 %v831, %v823
        %v1000 = vpack.c.b16 %v832, %v824
        %v1001 = vpack.c.b16 %v833, %v825
        %v1002 = vpack.c.b16 %v834, %v826
        %v1003 = vpack.c.b16 %v835, %v827
        %v1004 = vpack.c.b16 %v836, %v828
        %v1005 = vpack.c.b16 %v845, %v837
        %v1006 = vpack.c.b16 %v846, %v838
        %v1007 = vpack.c.b16 %v847, %v839
        %v1008 = vpack.c.b16 %v848, %v840
        %v1009 = vpack.c.b16 %v849, %v841
        %v1010 = vpack.c.b16 %v850, %v842
        %v1011 = vpack.c.b16 %v851, %v843
        %v1012 = vpack.c.b16 %v852, %v844
        %v1013 = vpack.c.b16 %v861, %v853
        %v1014 = vpack.c.b16 %v862, %v854
        %v1015 = vpack.c.b16 %v863, %v855
        %v1016 = vpack.c.b16 %v864, %v856
        %v1017 = vpack.c.b16 %v865, %v857
        %v1018 = vpack.c.b16 %v866, %v858
        %v1019 = vpack.c.b16 %v867, %v859
        %v1020 = vpack.c.b16 %v868, %v860
        %v1021 = vpack.c.b16 %v877, %v869
        %v1022 = vpack.c.b16 %v878, %v870
        %v1023 = vpack.c.b16 %v879, %v871
        %v1024 = vpack.c.b16 %v880, %v872
        %v1025 = vpack.c.b16 %v881, %v873
        %v1026 = vpack.c.b16 %v882, %v874
        %v1027 = vpack.c.b16 %v883, %v875
        %v1028 = vpack.c.b16 %v884, %v876
        %v1029 = vpack.c.b16 %v893, %v885
        %v1030 = vpack.c.b16 %v894, %v886
        %v1031 = vpack.c.b16 %v895, %v887
        %v1032 = vpack.c.b16 %v896, %v888
        %v1033 = vpack.c.b16 %v897, %v889
        %v1034 = vpack.c.b16 %v898, %v890
        %v1035 = vpack.c.b16 %v899, %v891
        %v1036 = vpack.c.b16 %v900, %v892
        %v1037 = vpack.c.b16 %v909, %v901
        %v1038 = vpack.c.b16 %v910, %v902
        %v1039 = vpack.c.b16 %v911, %v903
        %v1040 = vpack.c.b16 %v912, %v904
        %v1041 = vpack.c.b16 %v913, %v905
        %v1042 = vpack.c.b16 %v914, %v906
        %v1043 = vpack.c.b16 %v915, %v907
        %v1044 = vpack.c.b16 %v916, %v908
        %1173 = vmatprep.subr.bf16.mxu0 %v918
        %1174 = vmatpush1.bf16.msra.mxu0 %v917
        %1175 = vmatprep.subr.bf16.mxu0 %v926
        %1176 = vmatpush1.bf16.msra.mxu0 %v925
        %1177 = vmatprep.subr.bf16.mxu0 %v934
        %1178 = vmatpush1.bf16.msra.mxu0 %v933
        %1179 = vmatprep.subr.bf16.mxu0 %v942
        %1180 = vmatpush1.bf16.msra.mxu0 %v941
        %1181 = vmatprep.subr.bf16.mxu0 %v950
        %1182 = vmatpush1.bf16.msra.mxu0 %v949
        %1183 = vmatprep.subr.bf16.mxu0 %v958
        %1184 = vmatpush1.bf16.msra.mxu0 %v957
        %1185 = vmatprep.subr.bf16.mxu0 %v966
        %1186 = vmatpush1.bf16.msra.mxu0 %v965
        %1187 = vmatprep.subr.bf16.mxu0 %v974
        %1188 = vmatpush1.bf16.msra.mxu0 %v973
        %1189 = vmatprep.subr.bf16.mxu0 %v982
        %1190 = vmatpush1.bf16.msra.mxu0 %v981
        %1191 = vmatprep.subr.bf16.mxu0 %v990
        %1192 = vmatpush1.bf16.msra.mxu0 %v989
        %1193 = vmatprep.subr.bf16.mxu0 %v998
        %1194 = vmatpush1.bf16.msra.mxu0 %v997
        %1195 = vmatprep.subr.bf16.mxu0 %v1006
        %1196 = vmatpush1.bf16.msra.mxu0 %v1005
        %1197 = vmatprep.subr.bf16.mxu0 %v1014
        %1198 = vmatpush1.bf16.msra.mxu0 %v1013
        %1199 = vmatprep.subr.bf16.mxu0 %v1022
        %1200 = vmatpush1.bf16.msra.mxu0 %v1021
        %1201 = vmatprep.subr.bf16.mxu0 %v1030
        %1202 = vmatpush1.bf16.msra.mxu0 %v1029
        %1203 = vmatprep.subr.bf16.mxu0 %v1038
        %1204 = vmatpush1.bf16.msra.mxu0 %v1037
        %1205 = vmatprep.mubr.bf16.mxu0 %v502
        %1206 = vmatmul.mubr.bf16.gmra.mrb[0].mxu0 %v501
        %v1207 = vpop.f32.mrb[0].mxu0
        %v1208 = vadd.f32 %v416, %v1207
        %v1209 = vpop.f32.mrb[0].mxu0
        %v1210 = vadd.f32 %v420, %v1209
        %v1211 = vpop.f32.mrb[0].mxu0
        %v1212 = vadd.f32 %v416, %v1211
        %v1213 = vpop.f32.mrb[0].mxu0
        %v1214 = vadd.f32 %v420, %v1213
        %1215 = vmatprep.mubr.bf16.mxu0 %v504
        %1216 = vmatmul.mubr.bf16.gmra.mrb[0].mxu0 %v503
        %v1217 = vpop.f32.mrb[0].mxu0
        %v1218 = vadd.f32 %v416, %v1217
        %v1219 = vpop.f32.mrb[0].mxu0
        %v1220 = vadd.f32 %v420, %v1219
        %v1221 = vpop.f32.mrb[0].mxu0
        %v1222 = vadd.f32 %v416, %v1221
        %v1223 = vpop.f32.mrb[0].mxu0
        %v1224 = vadd.f32 %v420, %v1223
        %1225 = vmatprep.mubr.bf16.mxu0 %v506
        %1226 = vmatmul.mubr.bf16.gmra.mrb[0].mxu0 %v505
        %v1227 = vpop.f32.mrb[0].mxu0
        %v1228 = vadd.f32 %v416, %v1227
        %v1229 = vpop.f32.mrb[0].mxu0
        %v1230 = vadd.f32 %v420, %v1229
        %v1231 = vpop.f32.mrb[0].mxu0
        %v1232 = vadd.f32 %v416, %v1231
        %v1233 = vpop.f32.mrb[0].mxu0
        %v1234 = vadd.f32 %v420, %v1233
        %1235 = vmatprep.mubr.bf16.mxu0 %v508
        %1236 = vmatmul.mubr.bf16.gmra.mrb[0].mxu0 %v507
        %v1237 = vpop.f32.mrb[0].mxu0
        %v1238 = vadd.f32 %v416, %v1237
        %v1239 = vpop.f32.mrb[0].mxu0
        %v1240 = vadd.f32 %v420, %v1239
        %v1241 = vpop.f32.mrb[0].mxu0
        %v1242 = vadd.f32 %v416, %v1241
        %v1243 = vpop.f32.mrb[0].mxu0
        %v1244 = vadd.f32 %v420, %v1243
        %1245 = vmatprep.mubr.bf16.mxu0 %v510
        %1246 = vmatmul.mubr.bf16.gmra.mrb[0].mxu0 %v509
        %v1247 = vpop.f32.mrb[0].mxu0
        %v1248 = vadd.f32 %v416, %v1247
        %v1249 = vpop.f32.mrb[0].mxu0
        %v1250 = vadd.f32 %v420, %v1249
        %v1251 = vpop.f32.mrb[0].mxu0
        %v1252 = vadd.f32 %v416, %v1251
        %v1253 = vpop.f32.mrb[0].mxu0
        %v1254 = vadd.f32 %v420, %v1253
        %1255 = vmatprep.mubr.bf16.mxu0 %v512
        %1256 = vmatmul.mubr.bf16.gmra.mrb[0].mxu0 %v511
        %v1257 = vpop.f32.mrb[0].mxu0
        %v1258 = vadd.f32 %v416, %v1257
        %v1259 = vpop.f32.mrb[0].mxu0
        %v1260 = vadd.f32 %v420, %v1259
        %v1261 = vpop.f32.mrb[0].mxu0
        %v1262 = vadd.f32 %v416, %v1261
        %v1263 = vpop.f32.mrb[0].mxu0
        %v1264 = vadd.f32 %v420, %v1263
        %1265 = vmatprep.mubr.bf16.mxu0 %v514
        %1266 = vmatmul.mubr.bf16.gmra.mrb[0].mxu0 %v513
        %v1267 = vpop.f32.mrb[0].mxu0
        %v1268 = vadd.f32 %v416, %v1267
        %v1269 = vpop.f32.mrb[0].mxu0
        %v1270 = vadd.f32 %v420, %v1269
        %v1271 = vpop.f32.mrb[0].mxu0
        %v1272 = vadd.f32 %v416, %v1271
        %v1273 = vpop.f32.mrb[0].mxu0
        %v1274 = vadd.f32 %v420, %v1273
        %1275 = vmatprep.mubr.bf16.mxu0 %v516
        %1276 = vmatmul.mubr.bf16.gmra.mrb[0].mxu0 %v515
        %v1277 = vpop.f32.mrb[0].mxu0
        %v1278 = vadd.f32 %v416, %v1277
        %v1279 = vpop.f32.mrb[0].mxu0
        %v1280 = vadd.f32 %v420, %v1279
        %v1281 = vpop.f32.mrb[0].mxu0
        %v1282 = vadd.f32 %v416, %v1281
        %v1283 = vpop.f32.mrb[0].mxu0
        %v1284 = vadd.f32 %v420, %v1283
        %1285 = vdwg.mxu0
        %1286 = vmatprep.subr.bf16.mxu0 %v920
        %1287 = vmatpush1.bf16.msra.mxu0 %v919
        %1288 = vmatprep.subr.bf16.mxu0 %v928
        %1289 = vmatpush1.bf16.msra.mxu0 %v927
        %1290 = vmatprep.subr.bf16.mxu0 %v936
        %1291 = vmatpush1.bf16.msra.mxu0 %v935
        %1292 = vmatprep.subr.bf16.mxu0 %v944
        %1293 = vmatpush1.bf16.msra.mxu0 %v943
        %1294 = vmatprep.subr.bf16.mxu0 %v952
        %1295 = vmatpush1.bf16.msra.mxu0 %v951
        %1296 = vmatprep.subr.bf16.mxu0 %v960
        %1297 = vmatpush1.bf16.msra.mxu0 %v959
        %1298 = vmatprep.subr.bf16.mxu0 %v968
        %1299 = vmatpush1.bf16.msra.mxu0 %v967
        %1300 = vmatprep.subr.bf16.mxu0 %v976
        %1301 = vmatpush1.bf16.msra.mxu0 %v975
        %1302 = vmatprep.subr.bf16.mxu0 %v984
        %1303 = vmatpush1.bf16.msra.mxu0 %v983
        %1304 = vmatprep.subr.bf16.mxu0 %v992
        %1305 = vmatpush1.bf16.msra.mxu0 %v991
        %1306 = vmatprep.subr.bf16.mxu0 %v1000
        %1307 = vmatpush1.bf16.msra.mxu0 %v999
        %1308 = vmatprep.subr.bf16.mxu0 %v1008
        %1309 = vmatpush1.bf16.msra.mxu0 %v1007
        %1310 = vmatprep.subr.bf16.mxu0 %v1016
        %1311 = vmatpush1.bf16.msra.mxu0 %v1015
        %1312 = vmatprep.subr.bf16.mxu0 %v1024
        %1313 = vmatpush1.bf16.msra.mxu0 %v1023
        %1314 = vmatprep.subr.bf16.mxu0 %v1032
        %1315 = vmatpush1.bf16.msra.mxu0 %v1031
        %1316 = vmatprep.subr.bf16.mxu0 %v1040
        %1317 = vmatpush1.bf16.msra.mxu0 %v1039
        %1318 = vmatprep.mubr.bf16.mxu0 %v502
        %1319 = vmatmul.mubr.bf16.gmra.mrb[0].mxu0 %v501
        %v1320 = vpop.f32.mrb[0].mxu0
        %v1321 = vadd.f32 %v424, %v1320
        %v1322 = vpop.f32.mrb[0].mxu0
        %v1323 = vadd.f32 %v428, %v1322
        %v1324 = vpop.f32.mrb[0].mxu0
        %v1325 = vadd.f32 %v424, %v1324
        %v1326 = vpop.f32.mrb[0].mxu0
        %v1327 = vadd.f32 %v428, %v1326
        %1328 = vmatprep.mubr.bf16.mxu0 %v504
        %1329 = vmatmul.mubr.bf16.gmra.mrb[0].mxu0 %v503
        %v1330 = vpop.f32.mrb[0].mxu0
        %v1331 = vadd.f32 %v424, %v1330
        %v1332 = vpop.f32.mrb[0].mxu0
        %v1333 = vadd.f32 %v428, %v1332
        %v1334 = vpop.f32.mrb[0].mxu0
        %v1335 = vadd.f32 %v424, %v1334
        %v1336 = vpop.f32.mrb[0].mxu0
        %v1337 = vadd.f32 %v428, %v1336
        %1338 = vmatprep.mubr.bf16.mxu0 %v506
        %1339 = vmatmul.mubr.bf16.gmra.mrb[0].mxu0 %v505
        %v1340 = vpop.f32.mrb[0].mxu0
        %v1341 = vadd.f32 %v424, %v1340
        %v1342 = vpop.f32.mrb[0].mxu0
        %v1343 = vadd.f32 %v428, %v1342
        %v1344 = vpop.f32.mrb[0].mxu0
        %v1345 = vadd.f32 %v424, %v1344
        %v1346 = vpop.f32.mrb[0].mxu0
        %v1347 = vadd.f32 %v428, %v1346
        %1348 = vmatprep.mubr.bf16.mxu0 %v508
        %1349 = vmatmul.mubr.bf16.gmra.mrb[0].mxu0 %v507
        %v1350 = vpop.f32.mrb[0].mxu0
        %v1351 = vadd.f32 %v424, %v1350
        %v1352 = vpop.f32.mrb[0].mxu0
        %v1353 = vadd.f32 %v428, %v1352
        %v1354 = vpop.f32.mrb[0].mxu0
        %v1355 = vadd.f32 %v424, %v1354
        %v1356 = vpop.f32.mrb[0].mxu0
        %v1357 = vadd.f32 %v428, %v1356
        %1358 = vmatprep.mubr.bf16.mxu0 %v510
        %1359 = vmatmul.mubr.bf16.gmra.mrb[0].mxu0 %v509
        %v1360 = vpop.f32.mrb[0].mxu0
        %v1361 = vadd.f32 %v424, %v1360
        %v1362 = vpop.f32.mrb[0].mxu0
        %v1363 = vadd.f32 %v428, %v1362
        %v1364 = vpop.f32.mrb[0].mxu0
        %v1365 = vadd.f32 %v424, %v1364
        %v1366 = vpop.f32.mrb[0].mxu0
        %v1367 = vadd.f32 %v428, %v1366
        %1368 = vmatprep.mubr.bf16.mxu0 %v512
        %1369 = vmatmul.mubr.bf16.gmra.mrb[0].mxu0 %v511
        %v1370 = vpop.f32.mrb[0].mxu0
        %v1371 = vadd.f32 %v424, %v1370
        %v1372 = vpop.f32.mrb[0].mxu0
        %v1373 = vadd.f32 %v428, %v1372
        %v1374 = vpop.f32.mrb[0].mxu0
        %v1375 = vadd.f32 %v424, %v1374
        %v1376 = vpop.f32.mrb[0].mxu0
        %v1377 = vadd.f32 %v428, %v1376
        %1378 = vmatprep.mubr.bf16.mxu0 %v514
        %1379 = vmatmul.mubr.bf16.gmra.mrb[0].mxu0 %v513
        %v1380 = vpop.f32.mrb[0].mxu0
        %v1381 = vadd.f32 %v424, %v1380
        %v1382 = vpop.f32.mrb[0].mxu0
        %v1383 = vadd.f32 %v428, %v1382
        %v1384 = vpop.f32.mrb[0].mxu0
        %v1385 = vadd.f32 %v424, %v1384
        %v1386 = vpop.f32.mrb[0].mxu0
        %v1387 = vadd.f32 %v428, %v1386
        %1388 = vmatprep.mubr.bf16.mxu0 %v516
        %1389 = vmatmul.mubr.bf16.gmra.mrb[0].mxu0 %v515
        %v1390 = vpop.f32.mrb[0].mxu0
        %v1391 = vadd.f32 %v424, %v1390
        %v1392 = vpop.f32.mrb[0].mxu0
        %v1393 = vadd.f32 %v428, %v1392
        %v1394 = vpop.f32.mrb[0].mxu0
        %v1395 = vadd.f32 %v424, %v1394
        %v1396 = vpop.f32.mrb[0].mxu0
        %v1397 = vadd.f32 %v428, %v1396
        %1398 = vdwg.mxu0
        %1399 = vmatprep.subr.bf16.mxu0 %v922
        %1400 = vmatpush1.bf16.msra.mxu0 %v921
        %1401 = vmatprep.subr.bf16.mxu0 %v930
        %1402 = vmatpush1.bf16.msra.mxu0 %v929
        %1403 = vmatprep.subr.bf16.mxu0 %v938
        %1404 = vmatpush1.bf16.msra.mxu0 %v937
        %1405 = vmatprep.subr.bf16.mxu0 %v946
        %1406 = vmatpush1.bf16.msra.mxu0 %v945
        %1407 = vmatprep.subr.bf16.mxu0 %v954
        %1408 = vmatpush1.bf16.msra.mxu0 %v953
        %1409 = vmatprep.subr.bf16.mxu0 %v962
        %1410 = vmatpush1.bf16.msra.mxu0 %v961
        %1411 = vmatprep.subr.bf16.mxu0 %v970
        %1412 = vmatpush1.bf16.msra.mxu0 %v969
        %1413 = vmatprep.subr.bf16.mxu0 %v978
        %1414 = vmatpush1.bf16.msra.mxu0 %v977
        %1415 = vmatprep.subr.bf16.mxu0 %v986
        %1416 = vmatpush1.bf16.msra.mxu0 %v985
        %1417 = vmatprep.subr.bf16.mxu0 %v994
        %1418 = vmatpush1.bf16.msra.mxu0 %v993
        %1419 = vmatprep.subr.bf16.mxu0 %v1002
        %1420 = vmatpush1.bf16.msra.mxu0 %v1001
        %1421 = vmatprep.subr.bf16.mxu0 %v1010
        %1422 = vmatpush1.bf16.msra.mxu0 %v1009
        %1423 = vmatprep.subr.bf16.mxu0 %v1018
        %1424 = vmatpush1.bf16.msra.mxu0 %v1017
        %1425 = vmatprep.subr.bf16.mxu0 %v1026
        %1426 = vmatpush1.bf16.msra.mxu0 %v1025
        %1427 = vmatprep.subr.bf16.mxu0 %v1034
        %1428 = vmatpush1.bf16.msra.mxu0 %v1033
        %1429 = vmatprep.subr.bf16.mxu0 %v1042
        %1430 = vmatpush1.bf16.msra.mxu0 %v1041
        %1431 = vmatprep.mubr.bf16.mxu0 %v502
        %1432 = vmatmul.mubr.bf16.gmra.mrb[0].mxu0 %v501
        %v1433 = vpop.f32.mrb[0].mxu0
        %v1434 = vadd.f32 %v432, %v1433
        %v1435 = vpop.f32.mrb[0].mxu0
        %v1436 = vadd.f32 %v436, %v1435
        %v1437 = vpop.f32.mrb[0].mxu0
        %v1438 = vadd.f32 %v432, %v1437
        %v1439 = vpop.f32.mrb[0].mxu0
        %v1440 = vadd.f32 %v436, %v1439
        %1441 = vmatprep.mubr.bf16.mxu0 %v504
        %1442 = vmatmul.mubr.bf16.gmra.mrb[0].mxu0 %v503
        %v1443 = vpop.f32.mrb[0].mxu0
        %v1444 = vadd.f32 %v432, %v1443
        %v1445 = vpop.f32.mrb[0].mxu0
        %v1446 = vadd.f32 %v436, %v1445
        %v1447 = vpop.f32.mrb[0].mxu0
        %v1448 = vadd.f32 %v432, %v1447
        %v1449 = vpop.f32.mrb[0].mxu0
        %v1450 = vadd.f32 %v436, %v1449
        %1451 = vmatprep.mubr.bf16.mxu0 %v506
        %1452 = vmatmul.mubr.bf16.gmra.mrb[0].mxu0 %v505
        %v1453 = vpop.f32.mrb[0].mxu0
        %v1454 = vadd.f32 %v432, %v1453
        %v1455 = vpop.f32.mrb[0].mxu0
        %v1456 = vadd.f32 %v436, %v1455
        %v1457 = vpop.f32.mrb[0].mxu0
        %v1458 = vadd.f32 %v432, %v1457
        %v1459 = vpop.f32.mrb[0].mxu0
        %v1460 = vadd.f32 %v436, %v1459
        %1461 = vmatprep.mubr.bf16.mxu0 %v508
        %1462 = vmatmul.mubr.bf16.gmra.mrb[0].mxu0 %v507
        %v1463 = vpop.f32.mrb[0].mxu0
        %v1464 = vadd.f32 %v432, %v1463
        %v1465 = vpop.f32.mrb[0].mxu0
        %v1466 = vadd.f32 %v436, %v1465
        %v1467 = vpop.f32.mrb[0].mxu0
        %v1468 = vadd.f32 %v432, %v1467
        %v1469 = vpop.f32.mrb[0].mxu0
        %v1470 = vadd.f32 %v436, %v1469
        %1471 = vmatprep.mubr.bf16.mxu0 %v510
        %1472 = vmatmul.mubr.bf16.gmra.mrb[0].mxu0 %v509
        %v1473 = vpop.f32.mrb[0].mxu0
        %v1474 = vadd.f32 %v432, %v1473
        %v1475 = vpop.f32.mrb[0].mxu0
        %v1476 = vadd.f32 %v436, %v1475
        %v1477 = vpop.f32.mrb[0].mxu0
        %v1478 = vadd.f32 %v432, %v1477
        %v1479 = vpop.f32.mrb[0].mxu0
        %v1480 = vadd.f32 %v436, %v1479
        %1481 = vmatprep.mubr.bf16.mxu0 %v512
        %1482 = vmatmul.mubr.bf16.gmra.mrb[0].mxu0 %v511
        %v1483 = vpop.f32.mrb[0].mxu0
        %v1484 = vadd.f32 %v432, %v1483
        %v1485 = vpop.f32.mrb[0].mxu0
        %v1486 = vadd.f32 %v436, %v1485
        %v1487 = vpop.f32.mrb[0].mxu0
        %v1488 = vadd.f32 %v432, %v1487
        %v1489 = vpop.f32.mrb[0].mxu0
        %v1490 = vadd.f32 %v436, %v1489
        %1491 = vmatprep.mubr.bf16.mxu0 %v514
        %1492 = vmatmul.mubr.bf16.gmra.mrb[0].mxu0 %v513
        %v1493 = vpop.f32.mrb[0].mxu0
        %v1494 = vadd.f32 %v432, %v1493
        %v1495 = vpop.f32.mrb[0].mxu0
        %v1496 = vadd.f32 %v436, %v1495
        %v1497 = vpop.f32.mrb[0].mxu0
        %v1498 = vadd.f32 %v432, %v1497
        %v1499 = vpop.f32.mrb[0].mxu0
        %v1500 = vadd.f32 %v436, %v1499
        %1501 = vmatprep.mubr.bf16.mxu0 %v516
        %1502 = vmatmul.mubr.bf16.gmra.mrb[0].mxu0 %v515
        %v1503 = vpop.f32.mrb[0].mxu0
        %v1504 = vadd.f32 %v432, %v1503
        %v1505 = vpop.f32.mrb[0].mxu0
        %v1506 = vadd.f32 %v436, %v1505
        %v1507 = vpop.f32.mrb[0].mxu0
        %v1508 = vadd.f32 %v432, %v1507
        %v1509 = vpop.f32.mrb[0].mxu0
        %v1510 = vadd.f32 %v436, %v1509
        %1511 = vdwg.mxu0
        %1512 = vmatprep.subr.bf16.mxu0 %v924
        %1513 = vmatpush1.bf16.msra.mxu0 %v923
        %1514 = vmatprep.subr.bf16.mxu0 %v932
        %1515 = vmatpush1.bf16.msra.mxu0 %v931
        %1516 = vmatprep.subr.bf16.mxu0 %v940
        %1517 = vmatpush1.bf16.msra.mxu0 %v939
        %1518 = vmatprep.subr.bf16.mxu0 %v948
        %1519 = vmatpush1.bf16.msra.mxu0 %v947
        %1520 = vmatprep.subr.bf16.mxu0 %v956
        %1521 = vmatpush1.bf16.msra.mxu0 %v955
        %1522 = vmatprep.subr.bf16.mxu0 %v964
        %1523 = vmatpush1.bf16.msra.mxu0 %v963
        %1524 = vmatprep.subr.bf16.mxu0 %v972
        %1525 = vmatpush1.bf16.msra.mxu0 %v971
        %1526 = vmatprep.subr.bf16.mxu0 %v980
        %1527 = vmatpush1.bf16.msra.mxu0 %v979
        %1528 = vmatprep.subr.bf16.mxu0 %v988
        %1529 = vmatpush1.bf16.msra.mxu0 %v987
        %1530 = vmatprep.subr.bf16.mxu0 %v996
        %1531 = vmatpush1.bf16.msra.mxu0 %v995
        %1532 = vmatprep.subr.bf16.mxu0 %v1004
        %1533 = vmatpush1.bf16.msra.mxu0 %v1003
        %1534 = vmatprep.subr.bf16.mxu0 %v1012
        %1535 = vmatpush1.bf16.msra.mxu0 %v1011
        %1536 = vmatprep.subr.bf16.mxu0 %v1020
        %1537 = vmatpush1.bf16.msra.mxu0 %v1019
        %1538 = vmatprep.subr.bf16.mxu0 %v1028
        %1539 = vmatpush1.bf16.msra.mxu0 %v1027
        %1540 = vmatprep.subr.bf16.mxu0 %v1036
        %1541 = vmatpush1.bf16.msra.mxu0 %v1035
        %1542 = vmatprep.subr.bf16.mxu0 %v1044
        %1543 = vmatpush1.bf16.msra.mxu0 %v1043
        %1544 = vmatprep.mubr.bf16.mxu0 %v502
        %1545 = vmatmul.mubr.bf16.gmra.mrb[0].mxu0 %v501
        %v1546 = vpop.f32.mrb[0].mxu0
        %v1547 = vadd.f32 %v440, %v1546
        %v1548 = vpop.f32.mrb[0].mxu0
        %v1549 = vadd.f32 %v444, %v1548
        %v1550 = vpop.f32.mrb[0].mxu0
        %v1551 = vadd.f32 %v440, %v1550
        %v1552 = vpop.f32.mrb[0].mxu0
        %v1553 = vadd.f32 %v444, %v1552
        %1554 = vmatprep.mubr.bf16.mxu0 %v504
        %1555 = vmatmul.mubr.bf16.gmra.mrb[0].mxu0 %v503
        %v1556 = vpop.f32.mrb[0].mxu0
        %v1557 = vadd.f32 %v440, %v1556
        %v1558 = vpop.f32.mrb[0].mxu0
        %v1559 = vadd.f32 %v444, %v1558
        %v1560 = vpop.f32.mrb[0].mxu0
        %v1561 = vadd.f32 %v440, %v1560
        %v1562 = vpop.f32.mrb[0].mxu0
        %v1563 = vadd.f32 %v444, %v1562
        %1564 = vmatprep.mubr.bf16.mxu0 %v506
        %1565 = vmatmul.mubr.bf16.gmra.mrb[0].mxu0 %v505
        %v1566 = vpop.f32.mrb[0].mxu0
        %v1567 = vadd.f32 %v440, %v1566
        %v1568 = vpop.f32.mrb[0].mxu0
        %v1569 = vadd.f32 %v444, %v1568
        %v1570 = vpop.f32.mrb[0].mxu0
        %v1571 = vadd.f32 %v440, %v1570
        %v1572 = vpop.f32.mrb[0].mxu0
        %v1573 = vadd.f32 %v444, %v1572
        %1574 = vmatprep.mubr.bf16.mxu0 %v508
        %1575 = vmatmul.mubr.bf16.gmra.mrb[0].mxu0 %v507
        %v1576 = vpop.f32.mrb[0].mxu0
        %v1577 = vadd.f32 %v440, %v1576
        %v1578 = vpop.f32.mrb[0].mxu0
        %v1579 = vadd.f32 %v444, %v1578
        %v1580 = vpop.f32.mrb[0].mxu0
        %v1581 = vadd.f32 %v440, %v1580
        %v1582 = vpop.f32.mrb[0].mxu0
        %v1583 = vadd.f32 %v444, %v1582
        %1584 = vmatprep.mubr.bf16.mxu0 %v510
        %1585 = vmatmul.mubr.bf16.gmra.mrb[0].mxu0 %v509
        %v1586 = vpop.f32.mrb[0].mxu0
        %v1587 = vadd.f32 %v440, %v1586
        %v1588 = vpop.f32.mrb[0].mxu0
        %v1589 = vadd.f32 %v444, %v1588
        %v1590 = vpop.f32.mrb[0].mxu0
        %v1591 = vadd.f32 %v440, %v1590
        %v1592 = vpop.f32.mrb[0].mxu0
        %v1593 = vadd.f32 %v444, %v1592
        %1594 = vmatprep.mubr.bf16.mxu0 %v512
        %1595 = vmatmul.mubr.bf16.gmra.mrb[0].mxu0 %v511
        %v1596 = vpop.f32.mrb[0].mxu0
        %v1597 = vadd.f32 %v440, %v1596
        %v1598 = vpop.f32.mrb[0].mxu0
        %v1599 = vadd.f32 %v444, %v1598
        %v1600 = vpop.f32.mrb[0].mxu0
        %v1601 = vadd.f32 %v440, %v1600
        %v1602 = vpop.f32.mrb[0].mxu0
        %v1603 = vadd.f32 %v444, %v1602
        %1604 = vmatprep.mubr.bf16.mxu0 %v514
        %1605 = vmatmul.mubr.bf16.gmra.mrb[0].mxu0 %v513
        %v1606 = vpop.f32.mrb[0].mxu0
        %v1607 = vadd.f32 %v440, %v1606
        %v1608 = vpop.f32.mrb[0].mxu0
        %v1609 = vadd.f32 %v444, %v1608
        %v1610 = vpop.f32.mrb[0].mxu0
        %v1611 = vadd.f32 %v440, %v1610
        %v1612 = vpop.f32.mrb[0].mxu0
        %v1613 = vadd.f32 %v444, %v1612
        %1614 = vmatprep.mubr.bf16.mxu0 %v516
        %1615 = vmatmul.mubr.bf16.gmra.mrb[0].mxu0 %v515
        %v1616 = vpop.f32.mrb[0].mxu0
        %v1617 = vadd.f32 %v440, %v1616
        %v1618 = vpop.f32.mrb[0].mxu0
        %v1619 = vadd.f32 %v444, %v1618
        %v1620 = vpop.f32.mrb[0].mxu0
        %v1621 = vadd.f32 %v440, %v1620
        %v1622 = vpop.f32.mrb[0].mxu0
        %v1623 = vadd.f32 %v444, %v1622
        %1624 = vdwg.mxu0
        %1625 = vst [vmem:[%s261] sm:$0xff] %v1208
        %1626 = vst [vmem:[%s261 + $0x8] sm:$0xff] %v1210
        %1627 = vst [vmem:[%s261 + $0x10] sm:$0xff] %v1321
        %1628 = vst [vmem:[%s261 + $0x18] sm:$0xff] %v1323
        %1629 = vst [vmem:[%s261 + $0x20] sm:$0xff] %v1434
        %1630 = vst [vmem:[%s261 + $0x28] sm:$0xff] %v1436
        %1631 = vst [vmem:[%s261 + $0x30] sm:$0xff] %v1547
        %1632 = vst [vmem:[%s261 + $0x38] sm:$0xff] %v1549
        %1633 = vst [vmem:[%s261 + $0x40] sm:$0xff] %v1212
        %1634 = vst [vmem:[%s261 + $0x48] sm:$0xff] %v1214
        %1635 = vst [vmem:[%s261 + $0x50] sm:$0xff] %v1325
        %1636 = vst [vmem:[%s261 + $0x58] sm:$0xff] %v1327
        %1637 = vst [vmem:[%s261 + $0x60] sm:$0xff] %v1438
        %1638 = vst [vmem:[%s261 + $0x68] sm:$0xff] %v1440
        %1639 = vst [vmem:[%s261 + $0x70] sm:$0xff] %v1551
        %1640 = vst [vmem:[%s261 + $0x78] sm:$0xff] %v1553
        %1641 = vst [vmem:[%s261 + $0x80] sm:$0xff] %v1218
        %1642 = vst [vmem:[%s261 + $0x88] sm:$0xff] %v1220
        %1643 = vst [vmem:[%s261 + $0x90] sm:$0xff] %v1331
        %1644 = vst [vmem:[%s261 + $0x98] sm:$0xff] %v1333
        %1645 = vst [vmem:[%s261 + $0xa0] sm:$0xff] %v1444
        %1646 = vst [vmem:[%s261 + $0xa8] sm:$0xff] %v1446
        %1647 = vst [vmem:[%s261 + $0xb0] sm:$0xff] %v1557
        %1648 = vst [vmem:[%s261 + $0xb8] sm:$0xff] %v1559
        %1649 = vst [vmem:[%s261 + $0xc0] sm:$0xff] %v1222
        %1650 = vst [vmem:[%s261 + $0xc8] sm:$0xff] %v1224
        %1651 = vst [vmem:[%s261 + $0xd0] sm:$0xff] %v1335
        %1652 = vst [vmem:[%s261 + $0xd8] sm:$0xff] %v1337
        %1653 = vst [vmem:[%s261 + $0xe0] sm:$0xff] %v1448
        %1654 = vst [vmem:[%s261 + $0xe8] sm:$0xff] %v1450
        %1655 = vst [vmem:[%s261 + $0xf0] sm:$0xff] %v1561
        %1656 = vst [vmem:[%s261 + $0xf8] sm:$0xff] %v1563
        %1657 = vst [vmem:[%s261 + $0x100] sm:$0xff] %v1228
        %1658 = vst [vmem:[%s261 + $0x108] sm:$0xff] %v1230
        %1659 = vst [vmem:[%s261 + $0x110] sm:$0xff] %v1341
        %1660 = vst [vmem:[%s261 + $0x118] sm:$0xff] %v1343
        %1661 = vst [vmem:[%s261 + $0x120] sm:$0xff] %v1454
        %1662 = vst [vmem:[%s261 + $0x128] sm:$0xff] %v1456
        %1663 = vst [vmem:[%s261 + $0x130] sm:$0xff] %v1567
        %1664 = vst [vmem:[%s261 + $0x138] sm:$0xff] %v1569
        %1665 = vst [vmem:[%s261 + $0x140] sm:$0xff] %v1232
        %1666 = vst [vmem:[%s261 + $0x148] sm:$0xff] %v1234
        %1667 = vst [vmem:[%s261 + $0x150] sm:$0xff] %v1345
        %1668 = vst [vmem:[%s261 + $0x158] sm:$0xff] %v1347
        %1669 = vst [vmem:[%s261 + $0x160] sm:$0xff] %v1458
        %1670 = vst [vmem:[%s261 + $0x168] sm:$0xff] %v1460
        %1671 = vst [vmem:[%s261 + $0x170] sm:$0xff] %v1571
        %1672 = vst [vmem:[%s261 + $0x178] sm:$0xff] %v1573
        %1673 = vst [vmem:[%s261 + $0x180] sm:$0xff] %v1238
        %1674 = vst [vmem:[%s261 + $0x188] sm:$0xff] %v1240
        %1675 = vst [vmem:[%s261 + $0x190] sm:$0xff] %v1351
        %1676 = vst [vmem:[%s261 + $0x198] sm:$0xff] %v1353
        %1677 = vst [vmem:[%s261 + $0x1a0] sm:$0xff] %v1464
        %1678 = vst [vmem:[%s261 + $0x1a8] sm:$0xff] %v1466
        %1679 = vst [vmem:[%s261 + $0x1b0] sm:$0xff] %v1577
        %1680 = vst [vmem:[%s261 + $0x1b8] sm:$0xff] %v1579
        %1681 = vst [vmem:[%s261 + $0x1c0] sm:$0xff] %v1242
        %1682 = vst [vmem:[%s261 + $0x1c8] sm:$0xff] %v1244
        %1683 = vst [vmem:[%s261 + $0x1d0] sm:$0xff] %v1355
        %1684 = vst [vmem:[%s261 + $0x1d8] sm:$0xff] %v1357
        %1685 = vst [vmem:[%s261 + $0x1e0] sm:$0xff] %v1468
        %1686 = vst [vmem:[%s261 + $0x1e8] sm:$0xff] %v1470
        %1687 = vst [vmem:[%s261 + $0x1f0] sm:$0xff] %v1581
        %1688 = vst [vmem:[%s261 + $0x1f8] sm:$0xff] %v1583
        %1689 = vst [vmem:[%s261 + $0x200] sm:$0xff] %v1248
        %1690 = vst [vmem:[%s261 + $0x208] sm:$0xff] %v1250
        %1691 = vst [vmem:[%s261 + $0x210] sm:$0xff] %v1361
        %1692 = vst [vmem:[%s261 + $0x218] sm:$0xff] %v1363
        %1693 = vst [vmem:[%s261 + $0x220] sm:$0xff] %v1474
        %1694 = vst [vmem:[%s261 + $0x228] sm:$0xff] %v1476
        %1695 = vst [vmem:[%s261 + $0x230] sm:$0xff] %v1587
        %1696 = vst [vmem:[%s261 + $0x238] sm:$0xff] %v1589
        %1697 = vst [vmem:[%s261 + $0x240] sm:$0xff] %v1252
        %1698 = vst [vmem:[%s261 + $0x248] sm:$0xff] %v1254
        %1699 = vst [vmem:[%s261 + $0x250] sm:$0xff] %v1365
        %1700 = vst [vmem:[%s261 + $0x258] sm:$0xff] %v1367
        %1701 = vst [vmem:[%s261 + $0x260] sm:$0xff] %v1478
        %1702 = vst [vmem:[%s261 + $0x268] sm:$0xff] %v1480
        %1703 = vst [vmem:[%s261 + $0x270] sm:$0xff] %v1591
        %1704 = vst [vmem:[%s261 + $0x278] sm:$0xff] %v1593
        %1705 = vst [vmem:[%s261 + $0x280] sm:$0xff] %v1258
        %1706 = vst [vmem:[%s261 + $0x288] sm:$0xff] %v1260
        %1707 = vst [vmem:[%s261 + $0x290] sm:$0xff] %v1371
        %1708 = vst [vmem:[%s261 + $0x298] sm:$0xff] %v1373
        %1709 = vst [vmem:[%s261 + $0x2a0] sm:$0xff] %v1484
        %1710 = vst [vmem:[%s261 + $0x2a8] sm:$0xff] %v1486
        %1711 = vst [vmem:[%s261 + $0x2b0] sm:$0xff] %v1597
        %1712 = vst [vmem:[%s261 + $0x2b8] sm:$0xff] %v1599
        %1713 = vst [vmem:[%s261 + $0x2c0] sm:$0xff] %v1262
        %1714 = vst [vmem:[%s261 + $0x2c8] sm:$0xff] %v1264
        %1715 = vst [vmem:[%s261 + $0x2d0] sm:$0xff] %v1375
        %1716 = vst [vmem:[%s261 + $0x2d8] sm:$0xff] %v1377
        %1717 = vst [vmem:[%s261 + $0x2e0] sm:$0xff] %v1488
        %1718 = vst [vmem:[%s261 + $0x2e8] sm:$0xff] %v1490
        %1719 = vst [vmem:[%s261 + $0x2f0] sm:$0xff] %v1601
        %1720 = vst [vmem:[%s261 + $0x2f8] sm:$0xff] %v1603
        %1721 = vst [vmem:[%s261 + $0x300] sm:$0xff] %v1268
        %1722 = vst [vmem:[%s261 + $0x308] sm:$0xff] %v1270
        %1723 = vst [vmem:[%s261 + $0x310] sm:$0xff] %v1381
        %1724 = vst [vmem:[%s261 + $0x318] sm:$0xff] %v1383
        %1725 = vst [vmem:[%s261 + $0x320] sm:$0xff] %v1494
        %1726 = vst [vmem:[%s261 + $0x328] sm:$0xff] %v1496
        %1727 = vst [vmem:[%s261 + $0x330] sm:$0xff] %v1607
        %1728 = vst [vmem:[%s261 + $0x338] sm:$0xff] %v1609
        %1729 = vst [vmem:[%s261 + $0x340] sm:$0xff] %v1272
        %1730 = vst [vmem:[%s261 + $0x348] sm:$0xff] %v1274
        %1731 = vst [vmem:[%s261 + $0x350] sm:$0xff] %v1385
        %1732 = vst [vmem:[%s261 + $0x358] sm:$0xff] %v1387
        %1733 = vst [vmem:[%s261 + $0x360] sm:$0xff] %v1498
        %1734 = vst [vmem:[%s261 + $0x368] sm:$0xff] %v1500
        %1735 = vst [vmem:[%s261 + $0x370] sm:$0xff] %v1611
        %1736 = vst [vmem:[%s261 + $0x378] sm:$0xff] %v1613
        %1737 = vst [vmem:[%s261 + $0x380] sm:$0xff] %v1278
        %1738 = vst [vmem:[%s261 + $0x388] sm:$0xff] %v1280
        %1739 = vst [vmem:[%s261 + $0x390] sm:$0xff] %v1391
        %1740 = vst [vmem:[%s261 + $0x398] sm:$0xff] %v1393
        %1741 = vst [vmem:[%s261 + $0x3a0] sm:$0xff] %v1504
        %1742 = vst [vmem:[%s261 + $0x3a8] sm:$0xff] %v1506
        %1743 = vst [vmem:[%s261 + $0x3b0] sm:$0xff] %v1617
        %1744 = vst [vmem:[%s261 + $0x3b8] sm:$0xff] %v1619
        %1745 = vst [vmem:[%s261 + $0x3c0] sm:$0xff] %v1282
        %1746 = vst [vmem:[%s261 + $0x3c8] sm:$0xff] %v1284
        %1747 = vst [vmem:[%s261 + $0x3d0] sm:$0xff] %v1395
        %1748 = vst [vmem:[%s261 + $0x3d8] sm:$0xff] %v1397
        %1749 = vst [vmem:[%s261 + $0x3e0] sm:$0xff] %v1508
        %1750 = vst [vmem:[%s261 + $0x3e8] sm:$0xff] %v1510
        %1751 = vst [vmem:[%s261 + $0x3f0] sm:$0xff] %v1621
        %1752 = vst [vmem:[%s261 + $0x3f8] sm:$0xff] %v1623
        %s1753 = sand.u32 %s121, 1
        %s1754 = scalar_lea.sflag [#allocation4], %s1753
        %s1755 = sand.u32 %s121, 1
        %s1756 = smul.addr %s1755, 1024
        %s1757 = scalar_lea.vmem [#allocation8], %s1756
        // Predicated region
        $region45: #{tpu_custom_call.1} parent=31 // pred_check
          %p1758 = pneg %p131
        $region46: #{tpu_custom_call.1} parent=31 // pred_check_branch
          %1760 = sbr.rel (%p1758) target = $region48
        $region47: #{tpu_custom_call.1} parent=31 // pred_region
          %s1761 = smul.u32 16, %s25
          %s1762 = smul.u32 8, %s26
          %s1764 = ssub.s32 16384, 16384
          %1765 = vsyncadd %s1754, %s1764
          %s1766 = smul.addr %s1761, 16
          %s1767 = sadd.s32 %s1762, %s1766
          %s1768 = smul.addr %s1767, 128
          %s1769 = scalar_lea.hbm %s3, %s1768
          %s1770 = sshll.u32 %s1757, 4
          %s1771 = int_to_ptr.vmem [resolvable:$true] %s1770
          %1776 = dma.vmem_to_hbm [thread:$0]  %s1771, 16384, %s1769, %s1754, 1024, 2048, 64
        $region48: #{tpu_custom_call.1} parent=31 // pred_fallthru
          _
      $region32: #{tpu_custom_call.1} parent=5 // pred_fallthru
        _
      %p1777 = scmp.le.s32.totalorder 2, %s16
      // Predicated region
      $region49: #{tpu_custom_call.1} parent=5 // pred_check
        %p1778 = pneg %p1777
      $region50: #{tpu_custom_call.1} parent=5 // pred_check_branch
        %1780 = sbr.rel (%p1778) target = $region52
      $region51: #{tpu_custom_call.1} parent=5 // pred_region
        %s1781 = ssub.s32 %s16, 2
        // Predicated region
        $region53: #{tpu_custom_call.1} parent=51 // pred_check
          %p1782 = pneg %p137
        $region54: #{tpu_custom_call.1} parent=51 // pred_check_branch
          %1784 = sbr.rel (%p1782) target = $region56
        $region55: #{tpu_custom_call.1} parent=51 // pred_region
          %s1785 = sand.u32 %s122, 1
          %s1786 = scalar_lea.sflag [#allocation4], %s1785
          %s1787 = sand.u32 %s122, 1
          %s1788 = smul.addr %s1787, 1024
          %s1789 = scalar_lea.vmem [#allocation8], %s1788
          %1790 = dma.done %s1786, 16384
        $region56: #{tpu_custom_call.1} parent=51 // pred_fallthru
          _
      $region52: #{tpu_custom_call.1} parent=5 // pred_fallthru
        _
    $region6: #{tpu_custom_call.1} parent=1 // loop_footer
      %s20 = sadd.s32 1, %s16
    $region7: #{tpu_custom_call.1} parent=1 // loop_footer_branch
      %15 = sbr.rel target = $region3
    $region8: #{tpu_custom_call.1} parent=1 // loop_exit
      _
    %1791 = vsyncpa [#allocation3], 1
    %s1792 = scalar_lea.sflag [#allocation3], 1
    %1793 = vsyncpa %s1792, 1
    %1794 = vsyncpa [#allocation6], 1
    %s1795 = scalar_lea.sflag [#allocation6], 1
    %1796 = vsyncpa %s1795, 1
    %1797 = vsyncpa [#allocation4], 1
    %s1798 = scalar_lea.sflag [#allocation4], 1
    %1799 = vsyncpa %s1798, 1

</llo_original>
